<compile_context>
chip_gen: v6e
topology: v6e:2x2x1
jax: 0.10.0
libtpu: 0.0.40
codegen_flags: <defaults>
</compile_context>

<pallas_src>
import functools

import jax
import jax.numpy as jnp
from jax import lax
from jax.experimental import pallas as pl
from jax.experimental.pallas import tpu as pltpu


# ---------------------------------------------------------------------------
# Kernel
# ---------------------------------------------------------------------------

def _make_simclr_kernel(n_views, hw_total, hw_tile, chunk, needs_mask):
    """Fused backbone (1x1 conv + ReLU + global-avg-pool) + projection head."""
    inv_hw = 1.0 / float(hw_total)
    n_chunks = hw_tile // chunk
    align = 128 if chunk % 128 == 0 else chunk

    def kernel(*refs):
        x_refs = refs[:n_views]
        (wb_ref, bb_ref, w1_ref, b1_ref, gamma_ref, beta_ref,
         w2_ref, b2_ref, out_ref, acc_ref) = refs[n_views:]

        v = pl.program_id(0)                    # view axis     ("parallel")
        s = pl.program_id(1)                    # spatial tiles ("arbitrary")
        n_s = pl.num_programs(1)

        batch = x_refs[0].shape[0]
        feat_dim = wb_ref.shape[1]

        @pl.when(s == 0)
        def _():
            acc_ref[...] = jnp.zeros_like(acc_ref)

        # Weights are VMEM-resident (constant index_map, single-buffered); read once per step.
        wb = wb_ref[...]                        # (C, F) conv weight -- shared dot operand
        bb = bb_ref[...]                        # (1, F) conv bias (fp32)

        def accumulate_view(x_ref):
            # Chunked conv -> bias -> ReLU -> spatial-sum.  Only a (chunk, F) fp32
            # intermediate is materialized, never (N, F, hw_tile).
            def chunk_body(ci, carry):
                off = pl.multiple_of(ci * chunk, align)
                new = []
                for n in range(batch):          # static unroll (small demo batch)
                    xn = x_ref[n, :, pl.ds(off, chunk)]            # (C, chunk) streamed dtype
                    h = lax.dot_general(                            # (chunk, F) fp32 on MXU
                        xn, wb, (((0,), (0,)), ((), ())),
                        preferred_element_type=jnp.float32)
                    h = jnp.maximum(h + bb, 0.0)
                    if needs_mask:              # only traced for ragged H*W (tail tile)
                        g = (s * hw_tile + off
                             + lax.broadcasted_iota(jnp.int32, h.shape, 0))
                        h = jnp.where(g < hw_total, h, 0.0)
                    new.append(carry[n] + jnp.sum(h, axis=0, keepdims=True))
                return tuple(new)

            init = tuple(jnp.zeros((1, feat_dim), jnp.float32) for _ in range(batch))
            psums = lax.fori_loop(0, n_chunks, chunk_body, init, unroll=True)
            acc_ref[...] += jnp.concatenate(list(psums), axis=0)

        # Only touch the active view's tile; the idle view's block index is pinned by its
        # index_map so it is neither re-DMA'd nor loaded into vregs.
        if n_views == 1:
            accumulate_view(x_refs[0])
        else:
            for i in range(n_views):
                pl.when(v == i)(functools.partial(accumulate_view, x_refs[i]))

        @pl.when(s == n_s - 1)
        def _():
            feat = acc_ref[...] * inv_hw                            # global-average pool (N, F)
            # Projection head: Linear -> BatchNorm1d (train, per-view stats) -> ReLU -> Linear.
            z = jnp.dot(feat, w1_ref[...],
                        preferred_element_type=jnp.float32) + b1_ref[...]
            mu = jnp.mean(z, axis=0, keepdims=True)
            var = jnp.mean((z - mu) * (z - mu), axis=0, keepdims=True)
            z = (z - mu) * lax.rsqrt(var + 1e-5)
            z = z * gamma_ref[...] + beta_ref[...]
            z = jnp.maximum(z, 0.0)
            out = jnp.dot(z, w2_ref[...],
                          preferred_element_type=jnp.float32) + b2_ref[...]
            out_ref[...] = out.astype(out_ref.dtype)

    return kernel


# ---------------------------------------------------------------------------
# Tiling / VMEM planning
# ---------------------------------------------------------------------------

def _roundup(x, m):
    return ((x + m - 1) // m) * m


def _sublane_pack(dtype):
    return max(8, 32 // jnp.dtype(dtype).itemsize)      # 8 for fp32, 16 for bf16


def _padded_bytes_2d(rows, cols, dtype):
    it = jnp.dtype(dtype).itemsize
    return _roundup(max(rows, 1), _sublane_pack(dtype)) * _roundup(max(cols, 1), 128) * it


def _vmem_capacity_bytes():
    try:
        return int(pltpu.get_tpu_info().vmem_capacity_bytes)
    except Exception:
        return 64 << 20            # conservative fallback: v7x per-TensorCore VMEM


def _plan_spatial_tiling(hw, n, c, f, p, n_views, x_dtype, budget, hw_tile=None, chunk=None):
    """Pick the spatial DMA tile from the VMEM/DMA budget only, plus a compute chunk."""
    if hw_tile is None:
        if hw <= 128:
            hw_tile = hw                                  # block == full extent
        else:
            # VMEM that is NOT the streamed x tiles: single-buffered weights, out block,
            # accumulator, in-flight (chunk, F) conv intermediates, compiler headroom.
            fixed = (_padded_bytes_2d(c, f, x_dtype)                      # wb
                     + 4 * _padded_bytes_2d(1, f, jnp.float32)            # bb, b1, gamma, beta
                     + _padded_bytes_2d(f, f, jnp.float32)                # w1
                     + _padded_bytes_2d(f, p, jnp.float32)                # w2
                     + _padded_bytes_2d(1, p, jnp.float32)                # b2
                     + 2 * _padded_bytes_2d(n, p, jnp.float32)            # out block (dbl buf)
                     + _padded_bytes_2d(n, f, jnp.float32)                # acc scratch
                     + 4 * _padded_bytes_2d(512, f, jnp.float32)          # conv chunk wkg set
                     + (2 << 20))
            # Double-buffered x tile per view; fold the C axis' sublane padding into the cost.
            per_lane = (n_views * 2 * n
                        * _roundup(c, _sublane_pack(x_dtype))
                        * jnp.dtype(x_dtype).itemsize)
            max_tile = max(128, ((budget - fixed) // per_lane) // 128 * 128)
            upper = hw if hw % 128 == 0 else max(128, (hw // 128) * 128)
            hw_tile = int(min(upper, max_tile))
    assert hw_tile == hw or hw_tile % 128 == 0, (hw, hw_tile)

    if chunk is None:
        if hw_tile <= 512:
            chunk = hw_tile
        else:
            chunk = next(csz for csz in (512, 384, 256, 128) if hw_tile % csz == 0)
    assert hw_tile % chunk == 0, (hw_tile, chunk)

    n_hw = -(-hw // hw_tile)                   # cdiv grid; ragged tail handled by masking
    needs_mask = (hw % hw_tile) != 0
    return hw_tile, chunk, n_hw, needs_mask


def _weight_spec(shape):
    index_map = lambda v, s: (0, 0)
    # Constant-index weights: single-buffer them (double-buffering a constant block is
    # pure VMEM waste, which matters for realistic feature sizes).
    if hasattr(pl, "Buffered"):
        try:
            return pl.BlockSpec(shape, index_map, pipeline_mode=pl.Buffered(1))
        except TypeError:
            pass
    return pl.BlockSpec(shape, index_map)


# ---------------------------------------------------------------------------
# pallas_call wrapper
# ---------------------------------------------------------------------------

def _encode_views(xs, params, projection_dim, hw_tile=None, chunk=None):
    n_views = len(xs)
    N, C, HW = xs[0].shape
    wb, bb, w1, b1, gamma, beta, w2, b2 = params
    F = wb.shape[1]
    P = projection_dim
    x_dtype = xs[0].dtype

    vmem_cap = _vmem_capacity_bytes()
    budget = max(16 << 20, int(0.70 * vmem_cap))        # generation-aware scoped-VMEM budget

    hw_tile, chunk, n_hw, needs_mask = _plan_spatial_tiling(
        HW, N, C, F, P, n_views, x_dtype, budget, hw_tile, chunk)

    grid = (n_views, n_hw)
    # TODO(synk): for the single-view path on v7x (2 TensorCores) the "parallel" view axis has
    # extent 1; splitting the spatial reduction into per-core partial sums (+ a tiny combine
    # pass) would use both cores -- the batch axis itself cannot be split (BatchNorm stats).

    def x_index_map(i):
        if n_views == 1:
            return lambda v, s: (0, 0, s)
        # Active view follows s; an idle view is pinned at the block index it will have (or
        # had) at the view transition, so it never triggers an extra DMA.
        return lambda v, s: (0, 0,
                             jnp.where(v == i, s, jnp.where(v < i, 0, n_hw - 1)))

    in_specs = [pl.BlockSpec((N, C, hw_tile), x_index_map(i)) for i in range(n_views)]
    in_specs += [
        _weight_spec((C, F)),      # backbone 1x1-conv weight (streamed dtype)
        _weight_spec((1, F)),      # backbone bias (fp32)
        _weight_spec((F, F)),      # w1
        _weight_spec((1, F)),      # b1
        _weight_spec((1, F)),      # BN gamma
        _weight_spec((1, F)),      # BN beta
        _weight_spec((F, P)),      # w2
        _weight_spec((1, P)),      # b2
    ]
    out_spec = pl.BlockSpec((pl.Squeezed(), N, P), lambda v, s: (v, 0, 0))

    x_bytes = sum(int(x.size) * x.dtype.itemsize for x in xs)
    param_bytes = (int(wb.size) * jnp.dtype(x_dtype).itemsize
                   + sum(int(t.size) * 4 for t in (bb, w1, b1, gamma, beta, w2, b2)))
    flops = n_views * (2 * N * HW * C * F + 2 * N * F * F + 2 * N * F * P)

    return pl.pallas_call(
        _make_simclr_kernel(n_views, HW, hw_tile, chunk, needs_mask),
        out_shape=jax.ShapeDtypeStruct((n_views, N, P), jnp.float32),
        grid_spec=pltpu.PrefetchScalarGridSpec(
            num_scalar_prefetch=0,
            grid=grid,
            in_specs=in_specs,
            out_specs=out_spec,
            scratch_shapes=[pltpu.VMEM((N, F), jnp.float32)],
        ),
        compiler_params=pltpu.CompilerParams(
            dimension_semantics=("parallel", "arbitrary"),
            vmem_limit_bytes=int(budget),
        ),
        cost_estimate=pl.CostEstimate(
            flops=flops, transcendentals=n_views * F,
            bytes_accessed=x_bytes + param_bytes + n_views * N * P * 4),
    )(*xs, wb.astype(x_dtype), bb, w1, b1, gamma, beta, w2, b2)


def simclr_forward(params, projection_dim, x0, x1=None, *,
                   hw_tile=None, chunk=None, input_dtype=jnp.bfloat16):
    """Mirrors SimCLR.forward: returns out0 or (out0, out1).

    Views are streamed into the kernel in `input_dtype` (bf16 by default: the kernel is
    HBM-bound on reading x and the MXU is native bf16); all accumulation / BatchNorm math
    stays fp32 inside the kernel.
    """
    views = (x0,) if x1 is None else (x0, x1)
    N, C, H, W = x0.shape
    # NCHW -> (N, C, H*W): a contiguous reshape (no HBM transpose / copy).
    xs = tuple(v.reshape(N, C, H * W).astype(input_dtype) for v in views)
    out = _encode_views(xs, params, projection_dim, hw_tile=hw_tile, chunk=chunk)
    if x1 is None:
        return out[0]
    return out[0], out[1]


# ---------------------------------------------------------------------------
# Pure-JAX reference & params
# ---------------------------------------------------------------------------

def simclr_reference(params, projection_dim, x0, x1=None, input_dtype=None):
    """Pure-JAX reference.  If `input_dtype` is given, x and the conv weight are quantized to
    that dtype first (mirroring the kernel's streaming dtype) but all math stays fp32."""
    wb, bb, w1, b1, gamma, beta, w2, b2 = params
    wb_r = wb if input_dtype is None else wb.astype(input_dtype).astype(jnp.float32)

    def enc(x):
        N, C, H, W = x.shape
        xf = x.reshape(N, C, H * W)
        if input_dtype is not None:
            xf = xf.astype(input_dtype).astype(jnp.float32)
        h = jnp.einsum('ncs,cf->nsf', xf, wb_r, precision='highest') + bb
        h = jnp.maximum(h, 0.0)
        feat = jnp.mean(h, axis=1)
        z = jnp.dot(feat, w1, precision='highest') + b1
        mu = jnp.mean(z, axis=0, keepdims=True)
        var = jnp.mean((z - mu) ** 2, axis=0, keepdims=True)
        z = (z - mu) * lax.rsqrt(var + 1e-5) * gamma + beta
        z = jnp.maximum(z, 0.0)
        return jnp.dot(z, w2, precision='highest') + b2

    if x1 is None:
        return enc(x0)
    return enc(x0), enc(x1)


def init_params(key, in_channels, feature_size, projection_dim):
    k = jax.random.split(key, 6)
    f32 = jnp.float32
    wb = jax.random.normal(k[0], (in_channels, feature_size), f32) * (1.0 / jnp.sqrt(in_channels))
    bb = jax.random.normal(k[1], (1, feature_size), f32) * 0.01
    w1 = jax.random.normal(k[2], (feature_size, feature_size), f32) * (1.0 / jnp.sqrt(feature_size))
    b1 = jax.random.normal(k[3], (1, feature_size), f32) * 0.01
    gamma = jnp.ones((1, feature_size), f32)
    beta = jnp.zeros((1, feature_size), f32)
    w2 = jax.random.normal(k[4], (feature_size, projection_dim), f32) * (1.0 / jnp.sqrt(feature_size))
    b2 = jax.random.normal(k[5], (1, projection_dim), f32) * 0.01
    return (wb, bb, w1, b1, gamma, beta, w2, b2)


if __name__ == "__main__":
    # Small, module-consistent shapes: batch=2, channels=4, spatial=16x16,
    # feature_size=32, projection_dim=128.
    N, C, H, W = 2, 4, 16, 16
    FEATURE_SIZE = 32
    PROJECTION_DIM = 128

    key = jax.random.PRNGKey(0)
    kx0, kx1, kp = jax.random.split(key, 3)
    x0 = jax.random.normal(kx0, (N, C, H, W), jnp.float32)
    x1 = jax.random.normal(kx1, (N, C, H, W), jnp.float32)
    params = init_params(kp, C, FEATURE_SIZE, PROJECTION_DIM)

    # --- default bf16-streaming path, multi-step spatial accumulation (H*W=256 -> 2 tiles).
    fwd = jax.jit(functools.partial(simclr_forward, params, PROJECTION_DIM, hw_tile=128))
    out0, out1 = jax.block_until_ready(fwd(x0, x1))
    assert out0.shape == (N, PROJECTION_DIM) and out0.dtype == jnp.float32
    assert out1.shape == (N, PROJECTION_DIM)
    r0, r1 = simclr_reference(params, PROJECTION_DIM, x0, x1, input_dtype=jnp.bfloat16)
    assert float(jnp.max(jnp.abs(out0 - r0))) < 5e-3
    assert float(jnp.max(jnp.abs(out1 - r1))) < 5e-3

    # --- single spatial tile + chunked inner reduction loop (hw_tile=256, chunk=128).
    o0, o1 = jax.block_until_ready(
        simclr_forward(params, PROJECTION_DIM, x0, x1, hw_tile=256, chunk=128))
    assert float(jnp.max(jnp.abs(o0 - r0))) < 5e-3
    assert float(jnp.max(jnp.abs(o1 - r1))) < 5e-3

    # --- fp32 streaming path (tight tolerance against the fp32 reference).
    f0, f1 = jax.block_until_ready(
        simclr_forward(params, PROJECTION_DIM, x0, x1, hw_tile=128,
                       input_dtype=jnp.float32))
    rf0, rf1 = simclr_reference(params, PROJECTION_DIM, x0, x1)
    assert float(jnp.max(jnp.abs(f0 - rf0))) < 2e-3
    assert float(jnp.max(jnp.abs(f1 - rf1))) < 2e-3

    # --- single-view path (x1 is None) -- returns just out0.
    out_single = jax.block_until_ready(simclr_forward(params, PROJECTION_DIM, x0))
    assert out_single.shape == (N, PROJECTION_DIM)
    r_single = simclr_reference(params, PROJECTION_DIM, x0, input_dtype=jnp.bfloat16)
    assert float(jnp.max(jnp.abs(out_single - r_single))) < 5e-3

    # --- ragged spatial extent (H*W=144, not a multiple of 128): cdiv grid + masked tail tile.
    xr0 = jax.random.normal(jax.random.PRNGKey(1), (N, C, 12, 12), jnp.float32)
    xr1 = jax.random.normal(jax.random.PRNGKey(2), (N, C, 12, 12), jnp.float32)
    q0, q1 = jax.block_until_ready(simclr_forward(params, PROJECTION_DIM, xr0, xr1))
    s0, s1 = simclr_reference(params, PROJECTION_DIM, xr0, xr1, input_dtype=jnp.bfloat16)
    assert float(jnp.max(jnp.abs(q0 - s0))) < 5e-3
    assert float(jnp.max(jnp.abs(q1 - s1))) < 5e-3

    print("KERNEL_OK")
</pallas_src>

<mosaic_0001>
module attributes {stable_mosaic.version = 11 : i64} {
  func.func @kernel(%arg0: i32, %arg1: i32, %arg2: memref<2x4x128xbf16, #tpu.memory_space<vmem>>, %arg3: memref<2x4x128xbf16, #tpu.memory_space<vmem>>, %arg4: memref<4x32xbf16, #tpu.memory_space<vmem>>, %arg5: memref<1x32xf32, #tpu.memory_space<vmem>>, %arg6: memref<32x32xf32, #tpu.memory_space<vmem>>, %arg7: memref<1x32xf32, #tpu.memory_space<vmem>>, %arg8: memref<1x32xf32, #tpu.memory_space<vmem>>, %arg9: memref<1x32xf32, #tpu.memory_space<vmem>>, %arg10: memref<32x128xf32, #tpu.memory_space<vmem>>, %arg11: memref<1x128xf32, #tpu.memory_space<vmem>>, %arg12: memref<1x2x128xf32, #tpu.memory_space<vmem>>, %arg13: memref<2x32xf32, #tpu.memory_space<vmem>>) attributes {dimension_semantics = [#tpu.dimension_semantics<parallel>, #tpu.dimension_semantics<arbitrary>], iteration_bounds = array<i64: 2, 2>, scalar_prefetch = 0 : i64, scratch_operands = 1 : i64, tpu.core_type = #tpu.core_type<tc>, window_params = [{transform_indices = @transform_0, window_bounds = array<i64: 2, 4, 128>}, {transform_indices = @transform_1, window_bounds = array<i64: 2, 4, 128>}, {pipeline_mode = #tpu.pipeline_mode<synchronous>, transform_indices = @transform_2, window_bounds = array<i64: 4, 32>}, {pipeline_mode = #tpu.pipeline_mode<synchronous>, transform_indices = @transform_3, window_bounds = array<i64: 1, 32>}, {pipeline_mode = #tpu.pipeline_mode<synchronous>, transform_indices = @transform_4, window_bounds = array<i64: 32, 32>}, {pipeline_mode = #tpu.pipeline_mode<synchronous>, transform_indices = @transform_5, window_bounds = array<i64: 1, 32>}, {pipeline_mode = #tpu.pipeline_mode<synchronous>, transform_indices = @transform_6, window_bounds = array<i64: 1, 32>}, {pipeline_mode = #tpu.pipeline_mode<synchronous>, transform_indices = @transform_7, window_bounds = array<i64: 1, 32>}, {pipeline_mode = #tpu.pipeline_mode<synchronous>, transform_indices = @transform_8, window_bounds = array<i64: 32, 128>}, {pipeline_mode = #tpu.pipeline_mode<synchronous>, transform_indices = @transform_9, window_bounds = array<i64: 1, 128>}, {transform_indices = @transform_10, window_bounds = array<i64: 1, 2, 128>}]} {
    %c0_i32 = arith.constant 0 : i32
    %0 = arith.cmpi eq, %arg1, %c0_i32 : i32
    %1 = arith.extui %0 : i1 to i32
    %c0_i32_0 = arith.constant 0 : i32
    %2 = arith.cmpi ne, %1, %c0_i32_0 : i32
    scf.if %2 {
      %cst = arith.constant 0.000000e+00 : f32
      %14 = vector.broadcast %cst : f32 to vector<2x32xf32>
      %c0_9 = arith.constant 0 : index
      %c0_10 = arith.constant 0 : index
      %15 = vector.load %arg13[%c0_9, %c0_10] : memref<2x32xf32, #tpu.memory_space<vmem>>, vector<2x32xf32>
      tpu.vector_store %arg13[%c0_9, %c0_10], %14 {strides = array<i32>} : memref<2x32xf32, #tpu.memory_space<vmem>>, vector<2x32xf32>,
    } else {
    }
    %c0 = arith.constant 0 : index
    %c0_1 = arith.constant 0 : index
    %3 = vector.load %arg4[%c0, %c0_1] : memref<4x32xbf16, #tpu.memory_space<vmem>>, vector<4x32xbf16>
    %c0_2 = arith.constant 0 : index
    %c0_3 = arith.constant 0 : index
    %4 = vector.load %arg5[%c0_2, %c0_3] : memref<1x32xf32, #tpu.memory_space<vmem>>, vector<1x32xf32>
    %c0_i32_4 = arith.constant 0 : i32
    %5 = arith.cmpi eq, %arg0, %c0_i32_4 : i32
    %6 = arith.extui %5 : i1 to i32
    %c0_i32_5 = arith.constant 0 : i32
    %7 = arith.cmpi ne, %6, %c0_i32_5 : i32
    scf.if %7 {
      %cst = arith.constant 0.000000e+00 : f32
      %14 = vector.broadcast %cst : f32 to vector<1x32xf32>
      %cst_9 = arith.constant 0.000000e+00 : f32
      %15 = vector.broadcast %cst_9 : f32 to vector<1x32xf32>
      %c0_i32_10 = arith.constant 0 : i32
      %c128_i32 = arith.constant 128 : i32
      %16 = arith.muli %c0_i32_10, %c128_i32 : i32
      %17 = tpu.assume_multiple %16, 128 : i32
      %c0_11 = arith.constant 0 : index
      %c0_12 = arith.constant 0 : index
      %18 = arith.index_cast %17 : i32 to index
      %19 = vector.load %arg2[%c0_11, %c0_12, %18] : memref<2x4x128xbf16, #tpu.memory_space<vmem>>, vector<1x4x128xbf16>
      %20 = vector.shape_cast %19 : vector<1x4x128xbf16> to vector<4x128xbf16>
      %cst_13 = arith.constant dense<0.000000e+00> : vector<128x32xf32>
      %21 = tpu.matmul %20, %3, %cst_13 {dimension_numbers = #tpu.dot_dimension_numbers<[0], [0], [1], [1], [0, 1, 1, 1], [], []>} : vector<4x128xbf16>, vector<4x32xbf16>, vector<128x32xf32> -> vector<128x32xf32>
      %22 = vector.broadcast %4 : vector<1x32xf32> to vector<128x32xf32>
      %23 = arith.addf %21, %22 : vector<128x32xf32>
      %cst_14 = arith.constant 0.000000e+00 : f32
      %24 = vector.broadcast %cst_14 : f32 to vector<128x32xf32>
      %25 = arith.maximumf %23, %24 : vector<128x32xf32>
      %cst_15 = arith.constant dense<0.000000e+00> : vector<32xf32>
      %26 = vector.multi_reduction <add>, %25, %cst_15 [0] : vector<128x32xf32> to vector<32xf32>
      %27 = vector.shape_cast %26 : vector<32xf32> to vector<1x32xf32>
      %28 = arith.addf %14, %27 : vector<1x32xf32>
      %c1 = arith.constant 1 : index
      %c0_16 = arith.constant 0 : index
      %29 = arith.index_cast %17 : i32 to index
      %30 = vector.load %arg2[%c1, %c0_16, %29] : memref<2x4x128xbf16, #tpu.memory_space<vmem>>, vector<1x4x128xbf16>
      %31 = vector.shape_cast %30 : vector<1x4x128xbf16> to vector<4x128xbf16>
      %cst_17 = arith.constant dense<0.000000e+00> : vector<128x32xf32>
      %32 = tpu.matmul %31, %3, %cst_17 {dimension_numbers = #tpu.dot_dimension_numbers<[0], [0], [1], [1], [0, 1, 1, 1], [], []>} : vector<4x128xbf16>, vector<4x32xbf16>, vector<128x32xf32> -> vector<128x32xf32>
      %33 = vector.broadcast %4 : vector<1x32xf32> to vector<128x32xf32>
      %34 = arith.addf %32, %33 : vector<128x32xf32>
      %cst_18 = arith.constant 0.000000e+00 : f32
      %35 = vector.broadcast %cst_18 : f32 to vector<128x32xf32>
      %36 = arith.maximumf %34, %35 : vector<128x32xf32>
      %cst_19 = arith.constant dense<0.000000e+00> : vector<32xf32>
      %37 = vector.multi_reduction <add>, %36, %cst_19 [0] : vector<128x32xf32> to vector<32xf32>
      %38 = vector.shape_cast %37 : vector<32xf32> to vector<1x32xf32>
      %39 = arith.addf %15, %38 : vector<1x32xf32>
      %c1_i32_20 = arith.constant 1 : i32
      %c0_21 = arith.constant 0 : index
      %c0_22 = arith.constant 0 : index
      %40 = vector.load %arg13[%c0_21, %c0_22] : memref<2x32xf32, #tpu.memory_space<vmem>>, vector<2x32xf32>
      %41 = tpu.concatenate %28, %39 in 0 : vector<1x32xf32>, vector<1x32xf32> -> vector<2x32xf32>
      %42 = arith.addf %40, %41 : vector<2x32xf32>
      %c0_23 = arith.constant 0 : index
      %c0_24 = arith.constant 0 : index
      %43 = vector.load %arg13[%c0_23, %c0_24] : memref<2x32xf32, #tpu.memory_space<vmem>>, vector<2x32xf32>
      tpu.vector_store %arg13[%c0_23, %c0_24], %42 {strides = array<i32>} : memref<2x32xf32, #tpu.memory_space<vmem>>, vector<2x32xf32>,
    } else {
    }
    %c1_i32 = arith.constant 1 : i32
    %8 = arith.cmpi eq, %arg0, %c1_i32 : i32
    %9 = arith.extui %8 : i1 to i32
    %c0_i32_6 = arith.constant 0 : i32
    %10 = arith.cmpi ne, %9, %c0_i32_6 : i32
    scf.if %10 {
      %cst = arith.constant 0.000000e+00 : f32
      %14 = vector.broadcast %cst : f32 to vector<1x32xf32>
      %cst_9 = arith.constant 0.000000e+00 : f32
      %15 = vector.broadcast %cst_9 : f32 to vector<1x32xf32>
      %c0_i32_10 = arith.constant 0 : i32
      %c128_i32 = arith.constant 128 : i32
      %16 = arith.muli %c0_i32_10, %c128_i32 : i32
      %17 = tpu.assume_multiple %16, 128 : i32
      %c0_11 = arith.constant 0 : index
      %c0_12 = arith.constant 0 : index
      %18 = arith.index_cast %17 : i32 to index
      %19 = vector.load %arg3[%c0_11, %c0_12, %18] : memref<2x4x128xbf16, #tpu.memory_space<vmem>>, vector<1x4x128xbf16>
      %20 = vector.shape_cast %19 : vector<1x4x128xbf16> to vector<4x128xbf16>
      %cst_13 = arith.constant dense<0.000000e+00> : vector<128x32xf32>
      %21 = tpu.matmul %20, %3, %cst_13 {dimension_numbers = #tpu.dot_dimension_numbers<[0], [0], [1], [1], [0, 1, 1, 1], [], []>} : vector<4x128xbf16>, vector<4x32xbf16>, vector<128x32xf32> -> vector<128x32xf32>
      %22 = vector.broadcast %4 : vector<1x32xf32> to vector<128x32xf32>
      %23 = arith.addf %21, %22 : vector<128x32xf32>
      %cst_14 = arith.constant 0.000000e+00 : f32
      %24 = vector.broadcast %cst_14 : f32 to vector<128x32xf32>
      %25 = arith.maximumf %23, %24 : vector<128x32xf32>
      %cst_15 = arith.constant dense<0.000000e+00> : vector<32xf32>
      %26 = vector.multi_reduction <add>, %25, %cst_15 [0] : vector<128x32xf32> to vector<32xf32>
      %27 = vector.shape_cast %26 : vector<32xf32> to vector<1x32xf32>
      %28 = arith.addf %14, %27 : vector<1x32xf32>
      %c1 = arith.constant 1 : index
      %c0_16 = arith.constant 0 : index
      %29 = arith.index_cast %17 : i32 to index
      %30 = vector.load %arg3[%c1, %c0_16, %29] : memref<2x4x128xbf16, #tpu.memory_space<vmem>>, vector<1x4x128xbf16>
      %31 = vector.shape_cast %30 : vector<1x4x128xbf16> to vector<4x128xbf16>
      %cst_17 = arith.constant dense<0.000000e+00> : vector<128x32xf32>
      %32 = tpu.matmul %31, %3, %cst_17 {dimension_numbers = #tpu.dot_dimension_numbers<[0], [0], [1], [1], [0, 1, 1, 1], [], []>} : vector<4x128xbf16>, vector<4x32xbf16>, vector<128x32xf32> -> vector<128x32xf32>
      %33 = vector.broadcast %4 : vector<1x32xf32> to vector<128x32xf32>
      %34 = arith.addf %32, %33 : vector<128x32xf32>
      %cst_18 = arith.constant 0.000000e+00 : f32
      %35 = vector.broadcast %cst_18 : f32 to vector<128x32xf32>
      %36 = arith.maximumf %34, %35 : vector<128x32xf32>
      %cst_19 = arith.constant dense<0.000000e+00> : vector<32xf32>
      %37 = vector.multi_reduction <add>, %36, %cst_19 [0] : vector<128x32xf32> to vector<32xf32>
      %38 = vector.shape_cast %37 : vector<32xf32> to vector<1x32xf32>
      %39 = arith.addf %15, %38 : vector<1x32xf32>
      %c1_i32_20 = arith.constant 1 : i32
      %c0_21 = arith.constant 0 : index
      %c0_22 = arith.constant 0 : index
      %40 = vector.load %arg13[%c0_21, %c0_22] : memref<2x32xf32, #tpu.memory_space<vmem>>, vector<2x32xf32>
      %41 = tpu.concatenate %28, %39 in 0 : vector<1x32xf32>, vector<1x32xf32> -> vector<2x32xf32>
      %42 = arith.addf %40, %41 : vector<2x32xf32>
      %c0_23 = arith.constant 0 : index
      %c0_24 = arith.constant 0 : index
      %43 = vector.load %arg13[%c0_23, %c0_24] : memref<2x32xf32, #tpu.memory_space<vmem>>, vector<2x32xf32>
      tpu.vector_store %arg13[%c0_23, %c0_24], %42 {strides = array<i32>} : memref<2x32xf32, #tpu.memory_space<vmem>>, vector<2x32xf32>,
    } else {
    }
    %c1_i32_7 = arith.constant 1 : i32
    %11 = arith.cmpi eq, %arg1, %c1_i32_7 : i32
    %12 = arith.extui %11 : i1 to i32
    %c0_i32_8 = arith.constant 0 : i32
    %13 = arith.cmpi ne, %12, %c0_i32_8 : i32
    scf.if %13 {
      %c0_9 = arith.constant 0 : index
      %c0_10 = arith.constant 0 : index
      %14 = vector.load %arg13[%c0_9, %c0_10] : memref<2x32xf32, #tpu.memory_space<vmem>>, vector<2x32xf32>
      %cst = arith.constant 3.906250e-03 : f32
      %15 = vector.broadcast %cst : f32 to vector<2x32xf32>
      %16 = arith.mulf %14, %15 : vector<2x32xf32>
      %c0_11 = arith.constant 0 : index
      %c0_12 = arith.constant 0 : index
      %17 = vector.load %arg6[%c0_11, %c0_12] : memref<32x32xf32, #tpu.memory_space<vmem>>, vector<32x32xf32>
      %cst_13 = arith.constant dense<0.000000e+00> : vector<2x32xf32>
      %18 = tpu.matmul %16, %17, %cst_13 {dimension_numbers = #tpu.dot_dimension_numbers<[1], [0], [0], [1], [0, 0, 1, 1], [], []>} : vector<2x32xf32>, vector<32x32xf32>, vector<2x32xf32> -> vector<2x32xf32>
      %c0_14 = arith.constant 0 : index
      %c0_15 = arith.constant 0 : index
      %19 = vector.load %arg7[%c0_14, %c0_15] : memref<1x32xf32, #tpu.memory_space<vmem>>, vector<1x32xf32>
      %20 = vector.broadcast %19 : vector<1x32xf32> to vector<2x32xf32>
      %21 = arith.addf %18, %20 : vector<2x32xf32>
      %cst_16 = arith.constant dense<0.000000e+00> : vector<32xf32>
      %22 = vector.multi_reduction <add>, %21, %cst_16 [0] : vector<2x32xf32> to vector<32xf32>
      %23 = vector.shape_cast %22 : vector<32xf32> to vector<1x32xf32>
      %cst_17 = arith.constant 2.000000e+00 : f32
      %24 = vector.broadcast %cst_17 : f32 to vector<1x32xf32>
      %25 = arith.divf %23, %24 : vector<1x32xf32>
      %26 = vector.broadcast %25 : vector<1x32xf32> to vector<2x32xf32>
      %27 = arith.subf %21, %26 : vector<2x32xf32>
      %28 = vector.broadcast %25 : vector<1x32xf32> to vector<2x32xf32>
      %29 = arith.subf %21, %28 : vector<2x32xf32>
      %30 = arith.mulf %27, %29 : vector<2x32xf32>
      %cst_18 = arith.constant dense<0.000000e+00> : vector<32xf32>
      %31 = vector.multi_reduction <add>, %30, %cst_18 [0] : vector<2x32xf32> to vector<32xf32>
      %32 = vector.shape_cast %31 : vector<32xf32> to vector<1x32xf32>
      %cst_19 = arith.constant 2.000000e+00 : f32
      %33 = vector.broadcast %cst_19 : f32 to vector<1x32xf32>
      %34 = arith.divf %32, %33 : vector<1x32xf32>
      %35 = vector.broadcast %25 : vector<1x32xf32> to vector<2x32xf32>
      %36 = arith.subf %21, %35 : vector<2x32xf32>
      %cst_20 = arith.constant 9.99999974E-6 : f32
      %37 = vector.broadcast %cst_20 : f32 to vector<1x32xf32>
      %38 = arith.addf %34, %37 : vector<1x32xf32>
      %39 = math.rsqrt %38 : vector<1x32xf32>
      %40 = vector.broadcast %39 : vector<1x32xf32> to vector<2x32xf32>
      %41 = arith.mulf %36, %40 : vector<2x32xf32>
      %c0_21 = arith.constant 0 : index
      %c0_22 = arith.constant 0 : index
      %42 = vector.load %arg8[%c0_21, %c0_22] : memref<1x32xf32, #tpu.memory_space<vmem>>, vector<1x32xf32>
      %43 = vector.broadcast %42 : vector<1x32xf32> to vector<2x32xf32>
      %44 = arith.mulf %41, %43 : vector<2x32xf32>
      %c0_23 = arith.constant 0 : index
      %c0_24 = arith.constant 0 : index
      %45 = vector.load %arg9[%c0_23, %c0_24] : memref<1x32xf32, #tpu.memory_space<vmem>>, vector<1x32xf32>
      %46 = vector.broadcast %45 : vector<1x32xf32> to vector<2x32xf32>
      %47 = arith.addf %44, %46 : vector<2x32xf32>
      %cst_25 = arith.constant 0.000000e+00 : f32
      %48 = vector.broadcast %cst_25 : f32 to vector<2x32xf32>
      %49 = arith.maximumf %47, %48 : vector<2x32xf32>
      %c0_26 = arith.constant 0 : index
      %c0_27 = arith.constant 0 : index
      %50 = vector.load %arg10[%c0_26, %c0_27] : memref<32x128xf32, #tpu.memory_space<vmem>>, vector<32x128xf32>
      %cst_28 = arith.constant dense<0.000000e+00> : vector<2x128xf32>
      %51 = tpu.matmul %49, %50, %cst_28 {dimension_numbers = #tpu.dot_dimension_numbers<[1], [0], [0], [1], [0, 0, 1, 1], [], []>} : vector<2x32xf32>, vector<32x128xf32>, vector<2x128xf32> -> vector<2x128xf32>
      %c0_29 = arith.constant 0 : index
      %c0_30 = arith.constant 0 : index
      %52 = vector.load %arg11[%c0_29, %c0_30] : memref<1x128xf32, #tpu.memory_space<vmem>>, vector<1x128xf32>
      %53 = vector.broadcast %52 : vector<1x128xf32> to vector<2x128xf32>
      %54 = arith.addf %51, %53 : vector<2x128xf32>
      %c0_31 = arith.constant 0 : index
      %c0_32 = arith.constant 0 : index
      %c0_33 = arith.constant 0 : index
      %55 = vector.load %arg12[%c0_31, %c0_32, %c0_33] : memref<1x2x128xf32, #tpu.memory_space<vmem>>, vector<1x2x128xf32>
      %56 = vector.shape_cast %55 : vector<1x2x128xf32> to vector<2x128xf32>
      %57 = vector.shape_cast %54 : vector<2x128xf32> to vector<1x2x128xf32>
      tpu.vector_store %arg12[%c0_31, %c0_32, %c0_33], %57 {strides = array<i32>} : memref<1x2x128xf32, #tpu.memory_space<vmem>>, vector<1x2x128xf32>,
    } else {
    }
    return
  }
  func.func @transform_0(%arg0: i32, %arg1: i32) -> (i32, i32, i32) {
    %c0_i32 = arith.constant 0 : i32
    %0 = arith.cmpi eq, %arg0, %c0_i32 : i32
    %c0_i32_0 = arith.constant 0 : i32
    %1 = arith.cmpi slt, %arg0, %c0_i32_0 : i32
    %c0_i32_1 = arith.constant 0 : i32
    %c1_i32 = arith.constant 1 : i32
    %2 = arith.select %1, %c0_i32_1, %c1_i32 : i32
    %3 = arith.select %0, %arg1, %2 : i32
    %c0_i32_2 = arith.constant 0 : i32
    %c0_i32_3 = arith.constant 0 : i32
    %c0_i32_4 = arith.constant 0 : i32
    return %c0_i32_2, %c0_i32_3, %3 : i32, i32, i32
  }
  func.func @transform_1(%arg0: i32, %arg1: i32) -> (i32, i32, i32) {
    %c1_i32 = arith.constant 1 : i32
    %0 = arith.cmpi eq, %arg0, %c1_i32 : i32
    %c1_i32_0 = arith.constant 1 : i32
    %1 = arith.cmpi slt, %arg0, %c1_i32_0 : i32
    %c0_i32 = arith.constant 0 : i32
    %c1_i32_1 = arith.constant 1 : i32
    %2 = arith.select %1, %c0_i32, %c1_i32_1 : i32
    %3 = arith.select %0, %arg1, %2 : i32
    %c0_i32_2 = arith.constant 0 : i32
    %c0_i32_3 = arith.constant 0 : i32
    %c0_i32_4 = arith.constant 0 : i32
    return %c0_i32_2, %c0_i32_3, %3 : i32, i32, i32
  }
  func.func @transform_2(%arg0: i32, %arg1: i32) -> (i32, i32) {
    %c0_i32 = arith.constant 0 : i32
    %c0_i32_0 = arith.constant 0 : i32
    %c0_i32_1 = arith.constant 0 : i32
    return %c0_i32, %c0_i32_0 : i32, i32
  }
  func.func @transform_3(%arg0: i32, %arg1: i32) -> (i32, i32) {
    %c0_i32 = arith.constant 0 : i32
    %c0_i32_0 = arith.constant 0 : i32
    %c0_i32_1 = arith.constant 0 : i32
    return %c0_i32, %c0_i32_0 : i32, i32
  }
  func.func @transform_4(%arg0: i32, %arg1: i32) -> (i32, i32) {
    %c0_i32 = arith.constant 0 : i32
    %c0_i32_0 = arith.constant 0 : i32
    %c0_i32_1 = arith.constant 0 : i32
    return %c0_i32, %c0_i32_0 : i32, i32
  }
  func.func @transform_5(%arg0: i32, %arg1: i32) -> (i32, i32) {
    %c0_i32 = arith.constant 0 : i32
    %c0_i32_0 = arith.constant 0 : i32
    %c0_i32_1 = arith.constant 0 : i32
    return %c0_i32, %c0_i32_0 : i32, i32
  }
  func.func @transform_6(%arg0: i32, %arg1: i32) -> (i32, i32) {
    %c0_i32 = arith.constant 0 : i32
    %c0_i32_0 = arith.constant 0 : i32
    %c0_i32_1 = arith.constant 0 : i32
    return %c0_i32, %c0_i32_0 : i32, i32
  }
  func.func @transform_7(%arg0: i32, %arg1: i32) -> (i32, i32) {
    %c0_i32 = arith.constant 0 : i32
    %c0_i32_0 = arith.constant 0 : i32
    %c0_i32_1 = arith.constant 0 : i32
    return %c0_i32, %c0_i32_0 : i32, i32
  }
  func.func @transform_8(%arg0: i32, %arg1: i32) -> (i32, i32) {
    %c0_i32 = arith.constant 0 : i32
    %c0_i32_0 = arith.constant 0 : i32
    %c0_i32_1 = arith.constant 0 : i32
    return %c0_i32, %c0_i32_0 : i32, i32
  }
  func.func @transform_9(%arg0: i32, %arg1: i32) -> (i32, i32) {
    %c0_i32 = arith.constant 0 : i32
    %c0_i32_0 = arith.constant 0 : i32
    %c0_i32_1 = arith.constant 0 : i32
    return %c0_i32, %c0_i32_0 : i32, i32
  }
  func.func @transform_10(%arg0: i32, %arg1: i32) -> (i32, i32, i32) {
    %c0_i32 = arith.constant 0 : i32
    %c0_i32_0 = arith.constant 0 : i32
    %c0_i32_1 = arith.constant 0 : i32
    return %arg0, %c0_i32, %c0_i32_0 : i32, i32, i32
  }
}

</mosaic_0001>

<llo_original>
// kernel: simclr_forward.1
$region0: #{simclr_forward.1}
  #allocation0 [shape = 'u32[]', space=smem, size = 0x4, offset = 0x4, fixed_abs, tag = 'smem constant byte address 0x4 - core index']
  #allocation1 [shape = 'u32[144,128]{1,0:T(1,128)}', space=vmem, size = 0x12000, scoped, tag = 'internal scratch']
  #allocation2 [shape = 'f32[2,32]{1,0:T(2,128)}', space=vmem, size = 0x400, scoped, tag = 'scratch operand']
  %s0 = inlined_call_operand.vmem [shape: bf16[2,4,256], index: 0, kind: input, shape index: {}]
  %s1 = inlined_call_operand.vmem [shape: bf16[2,4,256], index: 1, kind: input, shape index: {}]
  %s2 = inlined_call_operand.vmem [shape: bf16[4,32], index: 2, kind: input, shape index: {}]
  %s3 = inlined_call_operand.vmem [shape: f32[1,32], index: 3, kind: input, shape index: {}]
  %s4 = inlined_call_operand.vmem [shape: f32[32,32], index: 4, kind: input, shape index: {}]
  %s5 = inlined_call_operand.vmem [shape: f32[1,32], index: 5, kind: input, shape index: {}]
  %s6 = inlined_call_operand.vmem [shape: f32[1,32], index: 6, kind: input, shape index: {}]
  %s7 = inlined_call_operand.vmem [shape: f32[1,32], index: 7, kind: input, shape index: {}]
  %s8 = inlined_call_operand.vmem [shape: f32[32,128], index: 8, kind: input, shape index: {}]
  %s9 = inlined_call_operand.vmem [shape: f32[1,128], index: 9, kind: input, shape index: {}]
  %s10 = inlined_call_operand.vmem [shape: f32[2,2,128], index: 10, kind: output, shape index: {}]
  %s11 = sld [smem:[#allocation0]]
  $region157: #{simclr_forward.1} parent=0
    _
  %s13 = ssub.s32 1, %s11
  %s14 = scalar_select 0, %s13, %s11
  $region1: #{simclr_forward.1} parent=0
    #allocation3 [shape = 'u8[4096]{0}', space=vmem, size = 0x1000, scoped, tag = 'input window, operand 0']
    #allocation4 [shape = 'u8[4096]{0}', space=vmem, size = 0x1000, scoped, tag = 'input window, operand 1']
    loop: start=0, step=1, limit=6
    $region2: #{simclr_forward.1} parent=1 // loop_pre_header
      _
    $region3: #{simclr_forward.1} parent=1 // loop_header
      %s16 = sphi 0, %s20
      %p17 = scmp.ge.s32.totalorder %s16, 6
      %s23 = sphi 0, %s35
      %s24 = sphi 0, %s31
      %s25 = sphi 0, %s23
      %s26 = sphi 0, %s24
      %s27 = sphi 0, %s25
      %s28 = sphi 0, %s26
      %s46 = sphi 0, %s48
      %s49 = sphi 0, %s46
      %s50 = sphi 0, %s49
      %s66 = sphi 0, %s50
      %s80 = sphi 0, %s82
      %s83 = sphi 0, %s80
      %s84 = sphi 0, %s83
      %s100 = sphi 0, %s84
      %s104 = sphi 0, %s104
      %s106 = sphi 0, %s104
      %s107 = sphi 0, %s106
      %s121 = sphi 0, %s107
      %s125 = sphi 0, %s125
      %s127 = sphi 0, %s125
      %s128 = sphi 0, %s127
      %s142 = sphi 0, %s128
      %s146 = sphi 0, %s146
      %s148 = sphi 0, %s146
      %s149 = sphi 0, %s148
      %s163 = sphi 0, %s149
      %s167 = sphi 0, %s167
      %s169 = sphi 0, %s167
      %s170 = sphi 0, %s169
      %s184 = sphi 0, %s170
      %s188 = sphi 0, %s188
      %s190 = sphi 0, %s188
      %s191 = sphi 0, %s190
      %s205 = sphi 0, %s191
      %s209 = sphi 0, %s209
      %s211 = sphi 0, %s209
      %s212 = sphi 0, %s211
      %s226 = sphi 0, %s212
      %s230 = sphi 0, %s230
      %s232 = sphi 0, %s230
      %s233 = sphi 0, %s232
      %s247 = sphi 0, %s233
      %s251 = sphi 0, %s251
      %s253 = sphi 0, %s251
      %s254 = sphi 0, %s253
      %s268 = sphi 0, %s254
      %s274 = sphi 0, %s276
      %s277 = sphi 0, %s274
      %s278 = sphi 0, %s277
      %s294 = sphi 0, %s278
    $region4: #{simclr_forward.1} parent=1 // loop_header_branch
      %19 = sbr.rel (%p17) target = $region8
    $region5: #{simclr_forward.1} parent=1 // loop_body
      %s21 = ssub.s32 %s16, 1
      %s22 = ssub.s32 %s16, 2
      %s29 = sadd.s32 1, %s24
      %p30 = scmp.ge.s32.totalorder %s29, 2
      %s31 = scalar_select %p30, 0, %s29
      %s32 = sadd.s32 1, %s23
      %s33 = scalar_select %p30, %s32, %s23
      %p34 = scmp.ge.s32.totalorder %s33, 2
      %s35 = scalar_select %p34, 0, %s33
      %p36 = scmp.eq.s32.totalorder %s23, 0
      %p37 = scmp.ge.s32.totalorder %s23, 0
      %s38 = scalar_select %p37, 1, 0
      %s39 = scalar_select %p36, %s24, %s38
      %p40 = scmp.eq.s32.totalorder %s35, 0
      %p41 = scmp.ge.s32.totalorder %s35, 0
      %s42 = scalar_select %p41, 1, 0
      %s43 = scalar_select %p40, %s31, %s42
      %s44 = ssub.s32 %s39, %s43
      %p45 = scmp.eq.s32.totalorder %s44, 0
      %s47 = sadd.s32 %s46, 1
      %s48 = scalar_select %p45, %s46, %s47
      %p51 = pneg %p45
      %p52 = scmp.eq.s32.totalorder %s16, 3
      %p53 = por %p51, %p52
      %p54 = scmp.ne.s32.totalorder %s46, %s49
      %p55 = scmp.eq.s32.totalorder %s16, 0
      %p56 = por %p54, %p55
      %p57 = scmp.ne.s32.totalorder %s46, %s49
      %p58 = scmp.eq.s32.totalorder %s21, 3
      %p59 = por %p57, %p58
      %p60 = scmp.ne.s32.totalorder %s49, %s50
      %p61 = scmp.eq.s32.totalorder %s21, 0
      %p62 = por %p60, %p61
      %p63 = scmp.ne.s32.totalorder %s49, %s50
      %p64 = scmp.eq.s32.totalorder %s22, 3
      %p65 = por %p63, %p64
      %p67 = scmp.ne.s32.totalorder %s50, %s66
      %p68 = scmp.eq.s32.totalorder %s22, 0
      %p69 = por %p67, %p68
      %p70 = scmp.eq.s32.totalorder %s23, 1
      %p71 = scmp.ge.s32.totalorder %s23, 1
      %s72 = scalar_select %p71, 1, 0
      %s73 = scalar_select %p70, %s24, %s72
      %p74 = scmp.eq.s32.totalorder %s35, 1
      %p75 = scmp.ge.s32.totalorder %s35, 1
      %s76 = scalar_select %p75, 1, 0
      %s77 = scalar_select %p74, %s31, %s76
      %s78 = ssub.s32 %s73, %s77
      %p79 = scmp.eq.s32.totalorder %s78, 0
      %s81 = sadd.s32 %s80, 1
      %s82 = scalar_select %p79, %s80, %s81
      %p85 = pneg %p79
      %p86 = scmp.eq.s32.totalorder %s16, 3
      %p87 = por %p85, %p86
      %p88 = scmp.ne.s32.totalorder %s80, %s83
      %p89 = scmp.eq.s32.totalorder %s16, 0
      %p90 = por %p88, %p89
      %p91 = scmp.ne.s32.totalorder %s80, %s83
      %p92 = scmp.eq.s32.totalorder %s21, 3
      %p93 = por %p91, %p92
      %p94 = scmp.ne.s32.totalorder %s83, %s84
      %p95 = scmp.eq.s32.totalorder %s21, 0
      %p96 = por %p94, %p95
      %p97 = scmp.ne.s32.totalorder %s83, %s84
      %p98 = scmp.eq.s32.totalorder %s22, 3
      %p99 = por %p97, %p98
      %p101 = scmp.ne.s32.totalorder %s84, %s100
      %p102 = scmp.eq.s32.totalorder %s22, 0
      %p103 = por %p101, %p102
      %s105 = sadd.s32 %s104, 1
      %p108 = scmp.eq.s32.totalorder %s16, 3
      %p109 = scmp.ne.s32.totalorder %s104, %s106
      %p110 = scmp.eq.s32.totalorder %s16, 0
      %p111 = por %p109, %p110
      %p112 = scmp.ne.s32.totalorder %s104, %s106
      %p113 = scmp.eq.s32.totalorder %s21, 3
      %p114 = por %p112, %p113
      %p115 = scmp.ne.s32.totalorder %s106, %s107
      %p116 = scmp.eq.s32.totalorder %s21, 0
      %p117 = por %p115, %p116
      %p118 = scmp.ne.s32.totalorder %s106, %s107
      %p119 = scmp.eq.s32.totalorder %s22, 3
      %p120 = por %p118, %p119
      %p122 = scmp.ne.s32.totalorder %s107, %s121
      %p123 = scmp.eq.s32.totalorder %s22, 0
      %p124 = por %p122, %p123
      %s126 = sadd.s32 %s125, 1
      %p129 = scmp.eq.s32.totalorder %s16, 3
      %p130 = scmp.ne.s32.totalorder %s125, %s127
      %p131 = scmp.eq.s32.totalorder %s16, 0
      %p132 = por %p130, %p131
      %p133 = scmp.ne.s32.totalorder %s125, %s127
      %p134 = scmp.eq.s32.totalorder %s21, 3
      %p135 = por %p133, %p134
      %p136 = scmp.ne.s32.totalorder %s127, %s128
      %p137 = scmp.eq.s32.totalorder %s21, 0
      %p138 = por %p136, %p137
      %p139 = scmp.ne.s32.totalorder %s127, %s128
      %p140 = scmp.eq.s32.totalorder %s22, 3
      %p141 = por %p139, %p140
      %p143 = scmp.ne.s32.totalorder %s128, %s142
      %p144 = scmp.eq.s32.totalorder %s22, 0
      %p145 = por %p143, %p144
      %s147 = sadd.s32 %s146, 1
      %p150 = scmp.eq.s32.totalorder %s16, 3
      %p151 = scmp.ne.s32.totalorder %s146, %s148
      %p152 = scmp.eq.s32.totalorder %s16, 0
      %p153 = por %p151, %p152
      %p154 = scmp.ne.s32.totalorder %s146, %s148
      %p155 = scmp.eq.s32.totalorder %s21, 3
      %p156 = por %p154, %p155
      %p157 = scmp.ne.s32.totalorder %s148, %s149
      %p158 = scmp.eq.s32.totalorder %s21, 0
      %p159 = por %p157, %p158
      %p160 = scmp.ne.s32.totalorder %s148, %s149
      %p161 = scmp.eq.s32.totalorder %s22, 3
      %p162 = por %p160, %p161
      %p164 = scmp.ne.s32.totalorder %s149, %s163
      %p165 = scmp.eq.s32.totalorder %s22, 0
      %p166 = por %p164, %p165
      %s168 = sadd.s32 %s167, 1
      %p171 = scmp.eq.s32.totalorder %s16, 3
      %p172 = scmp.ne.s32.totalorder %s167, %s169
      %p173 = scmp.eq.s32.totalorder %s16, 0
      %p174 = por %p172, %p173
      %p175 = scmp.ne.s32.totalorder %s167, %s169
      %p176 = scmp.eq.s32.totalorder %s21, 3
      %p177 = por %p175, %p176
      %p178 = scmp.ne.s32.totalorder %s169, %s170
      %p179 = scmp.eq.s32.totalorder %s21, 0
      %p180 = por %p178, %p179
      %p181 = scmp.ne.s32.totalorder %s169, %s170
      %p182 = scmp.eq.s32.totalorder %s22, 3
      %p183 = por %p181, %p182
      %p185 = scmp.ne.s32.totalorder %s170, %s184
      %p186 = scmp.eq.s32.totalorder %s22, 0
      %p187 = por %p185, %p186
      %s189 = sadd.s32 %s188, 1
      %p192 = scmp.eq.s32.totalorder %s16, 3
      %p193 = scmp.ne.s32.totalorder %s188, %s190
      %p194 = scmp.eq.s32.totalorder %s16, 0
      %p195 = por %p193, %p194
      %p196 = scmp.ne.s32.totalorder %s188, %s190
      %p197 = scmp.eq.s32.totalorder %s21, 3
      %p198 = por %p196, %p197
      %p199 = scmp.ne.s32.totalorder %s190, %s191
      %p200 = scmp.eq.s32.totalorder %s21, 0
      %p201 = por %p199, %p200
      %p202 = scmp.ne.s32.totalorder %s190, %s191
      %p203 = scmp.eq.s32.totalorder %s22, 3
      %p204 = por %p202, %p203
      %p206 = scmp.ne.s32.totalorder %s191, %s205
      %p207 = scmp.eq.s32.totalorder %s22, 0
      %p208 = por %p206, %p207
      %s210 = sadd.s32 %s209, 1
      %p213 = scmp.eq.s32.totalorder %s16, 3
      %p214 = scmp.ne.s32.totalorder %s209, %s211
      %p215 = scmp.eq.s32.totalorder %s16, 0
      %p216 = por %p214, %p215
      %p217 = scmp.ne.s32.totalorder %s209, %s211
      %p218 = scmp.eq.s32.totalorder %s21, 3
      %p219 = por %p217, %p218
      %p220 = scmp.ne.s32.totalorder %s211, %s212
      %p221 = scmp.eq.s32.totalorder %s21, 0
      %p222 = por %p220, %p221
      %p223 = scmp.ne.s32.totalorder %s211, %s212
      %p224 = scmp.eq.s32.totalorder %s22, 3
      %p225 = por %p223, %p224
      %p227 = scmp.ne.s32.totalorder %s212, %s226
      %p228 = scmp.eq.s32.totalorder %s22, 0
      %p229 = por %p227, %p228
      %s231 = sadd.s32 %s230, 1
      %p234 = scmp.eq.s32.totalorder %s16, 3
      %p235 = scmp.ne.s32.totalorder %s230, %s232
      %p236 = scmp.eq.s32.totalorder %s16, 0
      %p237 = por %p235, %p236
      %p238 = scmp.ne.s32.totalorder %s230, %s232
      %p239 = scmp.eq.s32.totalorder %s21, 3
      %p240 = por %p238, %p239
      %p241 = scmp.ne.s32.totalorder %s232, %s233
      %p242 = scmp.eq.s32.totalorder %s21, 0
      %p243 = por %p241, %p242
      %p244 = scmp.ne.s32.totalorder %s232, %s233
      %p245 = scmp.eq.s32.totalorder %s22, 3
      %p246 = por %p244, %p245
      %p248 = scmp.ne.s32.totalorder %s233, %s247
      %p249 = scmp.eq.s32.totalorder %s22, 0
      %p250 = por %p248, %p249
      %s252 = sadd.s32 %s251, 1
      %p255 = scmp.eq.s32.totalorder %s16, 3
      %p256 = scmp.ne.s32.totalorder %s251, %s253
      %p257 = scmp.eq.s32.totalorder %s16, 0
      %p258 = por %p256, %p257
      %p259 = scmp.ne.s32.totalorder %s251, %s253
      %p260 = scmp.eq.s32.totalorder %s21, 3
      %p261 = por %p259, %p260
      %p262 = scmp.ne.s32.totalorder %s253, %s254
      %p263 = scmp.eq.s32.totalorder %s21, 0
      %p264 = por %p262, %p263
      %p265 = scmp.ne.s32.totalorder %s253, %s254
      %p266 = scmp.eq.s32.totalorder %s22, 3
      %p267 = por %p265, %p266
      %p269 = scmp.ne.s32.totalorder %s254, %s268
      %p270 = scmp.eq.s32.totalorder %s22, 0
      %p271 = por %p269, %p270
      %s272 = ssub.s32 %s23, %s35
      %p273 = scmp.eq.s32.totalorder %s272, 0
      %s275 = sadd.s32 %s274, 1
      %s276 = scalar_select %p273, %s274, %s275
      %p279 = pneg %p273
      %p280 = scmp.eq.s32.totalorder %s16, 3
      %p281 = por %p279, %p280
      %p282 = scmp.ne.s32.totalorder %s274, %s277
      %p283 = scmp.eq.s32.totalorder %s16, 0
      %p284 = por %p282, %p283
      %p285 = scmp.ne.s32.totalorder %s274, %s277
      %p286 = scmp.eq.s32.totalorder %s21, 3
      %p287 = por %p285, %p286
      %p288 = scmp.ne.s32.totalorder %s277, %s278
      %p289 = scmp.eq.s32.totalorder %s21, 0
      %p290 = por %p288, %p289
      %p291 = scmp.ne.s32.totalorder %s277, %s278
      %p292 = scmp.eq.s32.totalorder %s22, 3
      %p293 = por %p291, %p292
      %p295 = scmp.ne.s32.totalorder %s278, %s294
      %p296 = scmp.eq.s32.totalorder %s22, 0
      %p297 = por %p295, %p296
      %p298 = scmp.le.s32.totalorder 1, %s16
      %p299 = scmp.lt.s32.totalorder %s16, 5
      %p300 = pnand %p298, %p299
      %p301 = pneg %p300
      // Predicated region
      $region9: #{simclr_forward.1} parent=5 // pred_check
        _
      $region10: #{simclr_forward.1} parent=5 // pred_check_branch
        %303 = sbr.rel (%p300) target = $region12
      $region11: #{simclr_forward.1} parent=5 // pred_region
        %s304 = ssub.s32 %s16, 1
        // Predicated region
        $region13: #{simclr_forward.1} parent=11 // pred_check
          %p305 = pneg %p117
        $region14: #{simclr_forward.1} parent=11 // pred_check_branch
          %307 = sbr.rel (%p305) target = $region16
        $region15: #{simclr_forward.1} parent=11 // pred_region
          _
        $region16: #{simclr_forward.1} parent=11 // pred_fallthru
          _
        // Predicated region
        $region17: #{simclr_forward.1} parent=11 // pred_check
          %p308 = pneg %p138
        $region18: #{simclr_forward.1} parent=11 // pred_check_branch
          %310 = sbr.rel (%p308) target = $region20
        $region19: #{simclr_forward.1} parent=11 // pred_region
          _
        $region20: #{simclr_forward.1} parent=11 // pred_fallthru
          _
        // Predicated region
        $region21: #{simclr_forward.1} parent=11 // pred_check
          %p311 = pneg %p159
        $region22: #{simclr_forward.1} parent=11 // pred_check_branch
          %313 = sbr.rel (%p311) target = $region24
        $region23: #{simclr_forward.1} parent=11 // pred_region
          _
        $region24: #{simclr_forward.1} parent=11 // pred_fallthru
          _
        // Predicated region
        $region25: #{simclr_forward.1} parent=11 // pred_check
          %p314 = pneg %p180
        $region26: #{simclr_forward.1} parent=11 // pred_check_branch
          %316 = sbr.rel (%p314) target = $region28
        $region27: #{simclr_forward.1} parent=11 // pred_region
          _
        $region28: #{simclr_forward.1} parent=11 // pred_fallthru
          _
        // Predicated region
        $region29: #{simclr_forward.1} parent=11 // pred_check
          %p317 = pneg %p201
        $region30: #{simclr_forward.1} parent=11 // pred_check_branch
          %319 = sbr.rel (%p317) target = $region32
        $region31: #{simclr_forward.1} parent=11 // pred_region
          _
        $region32: #{simclr_forward.1} parent=11 // pred_fallthru
          _
        // Predicated region
        $region33: #{simclr_forward.1} parent=11 // pred_check
          %p320 = pneg %p222
        $region34: #{simclr_forward.1} parent=11 // pred_check_branch
          %322 = sbr.rel (%p320) target = $region36
        $region35: #{simclr_forward.1} parent=11 // pred_region
          _
        $region36: #{simclr_forward.1} parent=11 // pred_fallthru
          _
        // Predicated region
        $region37: #{simclr_forward.1} parent=11 // pred_check
          %p323 = pneg %p243
        $region38: #{simclr_forward.1} parent=11 // pred_check_branch
          %325 = sbr.rel (%p323) target = $region40
        $region39: #{simclr_forward.1} parent=11 // pred_region
          _
        $region40: #{simclr_forward.1} parent=11 // pred_fallthru
          _
        // Predicated region
        $region41: #{simclr_forward.1} parent=11 // pred_check
          %p326 = pneg %p264
        $region42: #{simclr_forward.1} parent=11 // pred_check_branch
          %328 = sbr.rel (%p326) target = $region44
        $region43: #{simclr_forward.1} parent=11 // pred_region
          _
        $region44: #{simclr_forward.1} parent=11 // pred_fallthru
          _
      $region12: #{simclr_forward.1} parent=5 // pred_fallthru
        _
      %p329 = scmp.lt.s32.totalorder %s16, 4
      // Predicated region
      $region45: #{simclr_forward.1} parent=5 // pred_check
        %p330 = pneg %p329
      $region46: #{simclr_forward.1} parent=5 // pred_check_branch
        %332 = sbr.rel (%p330) target = $region48
      $region47: #{simclr_forward.1} parent=5 // pred_region
        // Predicated region
        $region49: #{simclr_forward.1} parent=47 // pred_check
          %p333 = pneg %p56
        $region50: #{simclr_forward.1} parent=47 // pred_check_branch
          %335 = sbr.rel (%p333) target = $region52
        $region51: #{simclr_forward.1} parent=47 // pred_region
          %s336 = sand.u32 %s46, 1
          %s337 = sand.u32 %s46, 1
          %s338 = smul.addr %s337, 4
          %s339 = scalar_lea.vmem [#allocation3], %s338
          %p340 = scmp.eq.s32.totalorder %s23, 0
          %p341 = scmp.ge.s32.totalorder %s23, 0
          %s342 = scalar_select %p341, 1, 0
          %s343 = scalar_select %p340, %s24, %s342
          %s344 = smul.addr %s343, 2
          %s345 = scalar_lea.vmem %s0, %s344
          // Predicated region
          $region53: #{simclr_forward.1} parent=51 // pred_check
            _
          $region54: #{simclr_forward.1} parent=51 // pred_check_branch
            %347 = sbr.rel (0) target = $region56
          $region55: #{simclr_forward.1} parent=51 // pred_region
            // Predicated region
            $region57: #{simclr_forward.1} parent=55 // pred_check
              _
            $region58: #{simclr_forward.1} parent=55 // pred_check_branch
              %349 = sbr.rel target = $region60
            $region59: #{simclr_forward.1} parent=55 // pred_region
              // Predicated region
              $region72: #{simclr_forward.1} parent=59 // pred_check
                _
              $region73: #{simclr_forward.1} parent=59 // pred_check_branch
                %367 = sbr.rel (0) target = $region75
              $region74: #{simclr_forward.1} parent=59 // pred_region
                %s369 = ssub.s32 4, 1
                loop: start=0, step=1, limit=1
                $region76: #{simclr_forward.1} parent=74 // loop_pre_header
                  _
                $region77: #{simclr_forward.1} parent=74 // loop_header
                  %s371 = sphi 0, %s375
                  %p372 = scmp.ge.s32.totalorder %s371, 1
                  %s376 = sphi %s345, %s345
                  %s377 = sphi %s339, %s339
                $region78: #{simclr_forward.1} parent=74 // loop_header_branch
                  %374 = sbr.rel (%p372) target = $region82
                $region79: #{simclr_forward.1} parent=74 // loop_body
                  %v378 = vld [vmem:[%s376] sm:%s369]
                  %379 = vst [vmem:[%s377] sm:%s369] %v378
                  %v380 = vld [vmem:[%s376 + $0x4] sm:%s369]
                  %381 = vst [vmem:[%s377 + $0x2] sm:%s369] %v380
                $region80: #{simclr_forward.1} parent=74 // loop_footer
                  %s375 = sadd.s32 1, %s371
                $region81: #{simclr_forward.1} parent=74 // loop_footer_branch
                  %370 = sbr.rel target = $region77
                $region82: #{simclr_forward.1} parent=74 // loop_exit
                  _
              $region75: #{simclr_forward.1} parent=59 // pred_fallthru
                _
            $region60: #{simclr_forward.1} parent=55 // pred_fallthru
              _
            // Predicated region
            $region61: #{simclr_forward.1} parent=55 // pred_check
              _
            $region62: #{simclr_forward.1} parent=55 // pred_check_branch
              %351 = sbr.rel (0) target = $region64
            $region63: #{simclr_forward.1} parent=55 // pred_region
              %s353 = ssub.s32 4, 1
              loop: start=0, step=1, limit=1
              $region65: #{simclr_forward.1} parent=63 // loop_pre_header
                _
              $region66: #{simclr_forward.1} parent=63 // loop_header
                %s355 = sphi 0, %s359
                %p356 = scmp.ge.s32.totalorder %s355, 1
                %s360 = sphi %s345, %s345
                %s361 = sphi %s339, %s339
              $region67: #{simclr_forward.1} parent=63 // loop_header_branch
                %358 = sbr.rel (%p356) target = $region71
              $region68: #{simclr_forward.1} parent=63 // loop_body
                %v362 = vld [vmem:[%s360] sm:%s353]
                %363 = vst [vmem:[%s361] sm:%s353] %v362
                %v364 = vld [vmem:[%s360 + $0x4] sm:%s353]
                %365 = vst [vmem:[%s361 + $0x2] sm:%s353] %v364
              $region69: #{simclr_forward.1} parent=63 // loop_footer
                %s359 = sadd.s32 1, %s355
              $region70: #{simclr_forward.1} parent=63 // loop_footer_branch
                %354 = sbr.rel target = $region66
              $region71: #{simclr_forward.1} parent=63 // loop_exit
                _
            $region64: #{simclr_forward.1} parent=55 // pred_fallthru
              _
          $region56: #{simclr_forward.1} parent=51 // pred_fallthru
            _
          %382 = vnop
        $region52: #{simclr_forward.1} parent=47 // pred_fallthru
          _
        // Predicated region
        $region83: #{simclr_forward.1} parent=47 // pred_check
          %p383 = pneg %p90
        $region84: #{simclr_forward.1} parent=47 // pred_check_branch
          %385 = sbr.rel (%p383) target = $region86
        $region85: #{simclr_forward.1} parent=47 // pred_region
          %s386 = sand.u32 %s80, 1
          %s387 = sand.u32 %s80, 1
          %s388 = smul.addr %s387, 4
          %s389 = scalar_lea.vmem [#allocation4], %s388
          %p390 = scmp.eq.s32.totalorder %s23, 1
          %p391 = scmp.ge.s32.totalorder %s23, 1
          %s392 = scalar_select %p391, 1, 0
          %s393 = scalar_select %p390, %s24, %s392
          %s394 = smul.addr %s393, 2
          %s395 = scalar_lea.vmem %s1, %s394
          // Predicated region
          $region87: #{simclr_forward.1} parent=85 // pred_check
            _
          $region88: #{simclr_forward.1} parent=85 // pred_check_branch
            %397 = sbr.rel (0) target = $region90
          $region89: #{simclr_forward.1} parent=85 // pred_region
            // Predicated region
            $region91: #{simclr_forward.1} parent=89 // pred_check
              _
            $region92: #{simclr_forward.1} parent=89 // pred_check_branch
              %399 = sbr.rel target = $region94
            $region93: #{simclr_forward.1} parent=89 // pred_region
              // Predicated region
              $region106: #{simclr_forward.1} parent=93 // pred_check
                _
              $region107: #{simclr_forward.1} parent=93 // pred_check_branch
                %417 = sbr.rel (0) target = $region109
              $region108: #{simclr_forward.1} parent=93 // pred_region
                %s419 = ssub.s32 4, 1
                loop: start=0, step=1, limit=1
                $region110: #{simclr_forward.1} parent=108 // loop_pre_header
                  _
                $region111: #{simclr_forward.1} parent=108 // loop_header
                  %s421 = sphi 0, %s425
                  %p422 = scmp.ge.s32.totalorder %s421, 1
                  %s426 = sphi %s395, %s395
                  %s427 = sphi %s389, %s389
                $region112: #{simclr_forward.1} parent=108 // loop_header_branch
                  %424 = sbr.rel (%p422) target = $region116
                $region113: #{simclr_forward.1} parent=108 // loop_body
                  %v428 = vld [vmem:[%s426] sm:%s419]
                  %429 = vst [vmem:[%s427] sm:%s419] %v428
                  %v430 = vld [vmem:[%s426 + $0x4] sm:%s419]
                  %431 = vst [vmem:[%s427 + $0x2] sm:%s419] %v430
                $region114: #{simclr_forward.1} parent=108 // loop_footer
                  %s425 = sadd.s32 1, %s421
                $region115: #{simclr_forward.1} parent=108 // loop_footer_branch
                  %420 = sbr.rel target = $region111
                $region116: #{simclr_forward.1} parent=108 // loop_exit
                  _
              $region109: #{simclr_forward.1} parent=93 // pred_fallthru
                _
            $region94: #{simclr_forward.1} parent=89 // pred_fallthru
              _
            // Predicated region
            $region95: #{simclr_forward.1} parent=89 // pred_check
              _
            $region96: #{simclr_forward.1} parent=89 // pred_check_branch
              %401 = sbr.rel (0) target = $region98
            $region97: #{simclr_forward.1} parent=89 // pred_region
              %s403 = ssub.s32 4, 1
              loop: start=0, step=1, limit=1
              $region99: #{simclr_forward.1} parent=97 // loop_pre_header
                _
              $region100: #{simclr_forward.1} parent=97 // loop_header
                %s405 = sphi 0, %s409
                %p406 = scmp.ge.s32.totalorder %s405, 1
                %s410 = sphi %s395, %s395
                %s411 = sphi %s389, %s389
              $region101: #{simclr_forward.1} parent=97 // loop_header_branch
                %408 = sbr.rel (%p406) target = $region105
              $region102: #{simclr_forward.1} parent=97 // loop_body
                %v412 = vld [vmem:[%s410] sm:%s403]
                %413 = vst [vmem:[%s411] sm:%s403] %v412
                %v414 = vld [vmem:[%s410 + $0x4] sm:%s403]
                %415 = vst [vmem:[%s411 + $0x2] sm:%s403] %v414
              $region103: #{simclr_forward.1} parent=97 // loop_footer
                %s409 = sadd.s32 1, %s405
              $region104: #{simclr_forward.1} parent=97 // loop_footer_branch
                %404 = sbr.rel target = $region100
              $region105: #{simclr_forward.1} parent=97 // loop_exit
                _
            $region98: #{simclr_forward.1} parent=89 // pred_fallthru
              _
          $region90: #{simclr_forward.1} parent=85 // pred_fallthru
            _
          %432 = vnop
        $region86: #{simclr_forward.1} parent=47 // pred_fallthru
          _
      $region48: #{simclr_forward.1} parent=5 // pred_fallthru
        _
      %p433 = scmp.le.s32.totalorder 1, %s16
      %p434 = scmp.lt.s32.totalorder %s16, 5
      %p435 = pnand %p433, %p434
      %p436 = pneg %p435
      // Predicated region
      $region117: #{simclr_forward.1} parent=5 // pred_check
        _
      $region118: #{simclr_forward.1} parent=5 // pred_check_branch
        %438 = sbr.rel (%p435) target = $region120
      $region119: #{simclr_forward.1} parent=5 // pred_region
        %s439 = ssub.s32 %s16, 1
        %s440 = sand.u32 %s49, 1
        %s441 = sand.u32 %s49, 1
        %s442 = smul.addr %s441, 4
        %s443 = scalar_lea.vmem [#allocation3], %s442
        // Predicated region
        $region121: #{simclr_forward.1} parent=119 // pred_check
          %p444 = pneg %p62
        $region122: #{simclr_forward.1} parent=119 // pred_check_branch
          %446 = sbr.rel (%p444) target = $region124
        $region123: #{simclr_forward.1} parent=119 // pred_region
          _
        $region124: #{simclr_forward.1} parent=119 // pred_fallthru
          _
        %s447 = sand.u32 %s83, 1
        %s448 = sand.u32 %s83, 1
        %s449 = smul.addr %s448, 4
        %s450 = scalar_lea.vmem [#allocation4], %s449
        // Predicated region
        $region125: #{simclr_forward.1} parent=119 // pred_check
          %p451 = pneg %p96
        $region126: #{simclr_forward.1} parent=119 // pred_check_branch
          %453 = sbr.rel (%p451) target = $region128
        $region127: #{simclr_forward.1} parent=119 // pred_region
          _
        $region128: #{simclr_forward.1} parent=119 // pred_fallthru
          _
        %s454 = sand.u32 %s49, 1
        %s455 = sand.u32 %s49, 1
        %s456 = smul.addr %s455, 4
        %s457 = scalar_lea.vmem [#allocation3], %s456
        %p458 = pneg %p62
        %p459 = pneg %p59
        %s460 = sand.u32 %s83, 1
        %s461 = sand.u32 %s83, 1
        %s462 = smul.addr %s461, 4
        %s463 = scalar_lea.vmem [#allocation4], %s462
        %p464 = pneg %p96
        %p465 = pneg %p93
        %p466 = pneg %p117
        %p467 = pneg %p114
        %p468 = pneg %p138
        %p469 = pneg %p135
        %p470 = pneg %p159
        %p471 = pneg %p156
        %p472 = pneg %p180
        %p473 = pneg %p177
        %p474 = pneg %p201
        %p475 = pneg %p198
        %p476 = pneg %p222
        %p477 = pneg %p219
        %p478 = pneg %p243
        %p479 = pneg %p240
        %p480 = pneg %p264
        %p481 = pneg %p261
        %p482 = pneg %p290
        %p483 = pneg %p287
        %p484 = scmp.lt.s32.totalorder %s25, 1
        %s485 = scalar_select %p484, %s25, 1
        %s486 = smul.addr %s485, 2
        %s487 = scalar_lea.vmem %s10, %s486
        %p488 = scmp.eq.s32.totalorder %s25, 0
        %p489 = scmp.ge.s32.totalorder %s25, 0
        %s490 = scalar_select %p489, 1, 0
        %s491 = scalar_select %p488, %s26, %s490
        %p492 = scmp.eq.s32.totalorder %s25, 1
        %p493 = scmp.ge.s32.totalorder %s25, 1
        %s494 = scalar_select %p493, 1, 0
        %s495 = scalar_select %p492, %s26, %s494
        %p496 = scmp.lt.s32.totalorder %s25, 1
        %s497 = scalar_select %p496, %s25, 1
        %s498 = smul.addr %s497, 2
        %s499 = scalar_lea.vmem %s10, %s498
        %p501 = scmp.eq.s32.totalorder %s26, 0
        // Predicated region
        $region129: #{simclr_forward.1} parent=119 // pred_check
          %p502 = pneg %p501
        $region130: #{simclr_forward.1} parent=119 // pred_check_branch
          %504 = sbr.rel (%p502) target = $region132
        $region131: #{simclr_forward.1} parent=119 // pred_region
          %vm505 = vcmask 254976
          %506 = vst.msk [vmem:[#allocation2] sm:$0x3] %vm505, 0.0
        $region132: #{simclr_forward.1} parent=119 // pred_fallthru
          _
        %v507 = vld [vmem:[%s2] sm:$0x3]
        %v508 = vld [vmem:[%s3] sm:$0x1]
        %p509 = scmp.eq.s32.totalorder %s25, 0
        // Predicated region
        $region133: #{simclr_forward.1} parent=119 // pred_check
          %p510 = pneg %p509
        $region134: #{simclr_forward.1} parent=119 // pred_check_branch
          %512 = sbr.rel (%p510) target = $region136
        $region135: #{simclr_forward.1} parent=119 // pred_region
          %v513 = vld [vmem:[%s443] sm:$0x3]
          %v515 = vlaneseq
          %v516 = vshrl.u32 %v515, 7
          %v517 = vsub.s32 0, %v516
          %v518 = vrot.slane %v508, %v517
          %520 = vxpose.xlu0.c.b16.start [1/8] %v513, 128
          %521 = vxpose.xlu0.c.b16.cont [2/8] 0, 128
          %522 = vxpose.xlu0.c.b16.cont [3/8] 0, 128
          %523 = vxpose.xlu0.c.b16.cont [4/8] 0, 128
          %524 = vxpose.xlu0.c.b16.cont [5/8] 0, 128
          %525 = vxpose.xlu0.c.b16.cont [6/8] 0, 128
          %526 = vxpose.xlu0.c.b16.cont [7/8] 0, 128
          %527 = vxpose.xlu0.c.b16.end [8/8] 0, 128
          %v528 = vpop.trf.xlu0
          %v529 = vpop.trf.xlu0
          %v530 = vpop.trf.xlu0
          %v531 = vpop.trf.xlu0
          %v532 = vpop.trf.xlu0
          %v533 = vpop.trf.xlu0
          %v534 = vpop.trf.xlu0
          %v535 = vpop.trf.xlu0
          %vm536 = vcmask 31744
          %v538 = vsel %vm536, %v528, 0
          %v541 = vsel %vm536, %v529, 0
          %v544 = vsel %vm536, %v530, 0
          %v547 = vsel %vm536, %v531, 0
          %v550 = vsel %vm536, %v532, 0
          %v553 = vsel %vm536, %v533, 0
          %v556 = vsel %vm536, %v534, 0
          %v559 = vsel %vm536, %v535, 0
          %vm561 = vcmask 1041408
          %v563 = vsel %vm561, %v507, 0
          %565 = vmatprep.subr.bf16.mxu0 0
          %566 = vmatpush1.bf16.msra.mxu0 0
          %567 = vmatprep.subr.bf16.mxu0 0
          %568 = vmatpush1.bf16.msra.mxu0 0
          %569 = vmatprep.subr.bf16.mxu0 0
          %570 = vmatpush1.bf16.msra.mxu0 0
          %571 = vmatprep.subr.bf16.mxu0 0
          %572 = vmatpush1.bf16.msra.mxu0 0
          %573 = vmatprep.subr.bf16.mxu0 0
          %574 = vmatpush1.bf16.msra.mxu0 0
          %575 = vmatprep.subr.bf16.mxu0 0
          %576 = vmatpush1.bf16.msra.mxu0 0
          %577 = vmatprep.subr.bf16.mxu0 0
          %578 = vmatpush1.bf16.msra.mxu0 0
          %579 = vmatprep.subr.bf16.mxu0 0
          %580 = vmatpush1.bf16.msra.mxu0 %v563
          %581 = vmatprep.subr.bf16.mxu0 0
          %582 = vmatpush2.bf16.msra.mxu0 0
          %583 = vmatprep.subr.bf16.mxu0 0
          %584 = vmatpush2.bf16.msra.mxu0 0
          %585 = vmatprep.subr.bf16.mxu0 0
          %586 = vmatpush2.bf16.msra.mxu0 0
          %587 = vmatprep.subr.bf16.mxu0 0
          %588 = vmatpush2.bf16.msra.mxu0 0
          %589 = vmatprep.subr.bf16.mxu0 0
          %590 = vmatpush2.bf16.msra.mxu0 0
          %591 = vmatprep.subr.bf16.mxu0 0
          %592 = vmatpush2.bf16.msra.mxu0 0
          %593 = vmatprep.subr.bf16.mxu0 0
          %594 = vmatpush2.bf16.msra.mxu0 0
          %595 = vmatprep.subr.bf16.mxu0 0
          %596 = vmatpush2.bf16.msra.mxu0 0
          %597 = vmatprep.mubr.bf16.mxu0 0
          %598 = vmatmul.mubr.bf16.gmra.mxu0 %v538
          %v599 = vpop.f32.mrf.mxu0
          %v600 = vadd.f32 %v518, %v599
          %v601 = vpop.f32.mrf.mxu0
          %v602 = vpop.f32.mrf.mxu0
          %v603 = vadd.f32 %v518, %v602
          %v604 = vpop.f32.mrf.mxu0
          %605 = vmatprep.mubr.bf16.mxu0 0
          %606 = vmatmul.mubr.bf16.gmra.mxu0 %v541
          %v607 = vpop.f32.mrf.mxu0
          %v608 = vadd.f32 %v518, %v607
          %v609 = vpop.f32.mrf.mxu0
          %v610 = vpop.f32.mrf.mxu0
          %v611 = vadd.f32 %v518, %v610
          %v612 = vpop.f32.mrf.mxu0
          %613 = vmatprep.mubr.bf16.mxu0 0
          %614 = vmatmul.mubr.bf16.gmra.mxu0 %v544
          %v615 = vpop.f32.mrf.mxu0
          %v616 = vadd.f32 %v518, %v615
          %v617 = vpop.f32.mrf.mxu0
          %v618 = vpop.f32.mrf.mxu0
          %v619 = vadd.f32 %v518, %v618
          %v620 = vpop.f32.mrf.mxu0
          %621 = vmatprep.mubr.bf16.mxu0 0
          %622 = vmatmul.mubr.bf16.gmra.mxu0 %v547
          %v623 = vpop.f32.mrf.mxu0
          %v624 = vadd.f32 %v518, %v623
          %v625 = vpop.f32.mrf.mxu0
          %v626 = vpop.f32.mrf.mxu0
          %v627 = vadd.f32 %v518, %v626
          %v628 = vpop.f32.mrf.mxu0
          %629 = vmatprep.mubr.bf16.mxu0 0
          %630 = vmatmul.mubr.bf16.gmra.mxu0 %v550
          %v631 = vpop.f32.mrf.mxu0
          %v632 = vadd.f32 %v518, %v631
          %v633 = vpop.f32.mrf.mxu0
          %v634 = vpop.f32.mrf.mxu0
          %v635 = vadd.f32 %v518, %v634
          %v636 = vpop.f32.mrf.mxu0
          %637 = vmatprep.mubr.bf16.mxu0 0
          %638 = vmatmul.mubr.bf16.gmra.mxu0 %v553
          %v639 = vpop.f32.mrf.mxu0
          %v640 = vadd.f32 %v518, %v639
          %v641 = vpop.f32.mrf.mxu0
          %v642 = vpop.f32.mrf.mxu0
          %v643 = vadd.f32 %v518, %v642
          %v644 = vpop.f32.mrf.mxu0
          %645 = vmatprep.mubr.bf16.mxu0 0
          %646 = vmatmul.mubr.bf16.gmra.mxu0 %v556
          %v647 = vpop.f32.mrf.mxu0
          %v648 = vadd.f32 %v518, %v647
          %v649 = vpop.f32.mrf.mxu0
          %v650 = vpop.f32.mrf.mxu0
          %v651 = vadd.f32 %v518, %v650
          %v652 = vpop.f32.mrf.mxu0
          %653 = vmatprep.mubr.bf16.mxu0 0
          %654 = vmatmul.mubr.bf16.gmra.mxu0 %v559
          %v655 = vpop.f32.mrf.mxu0
          %v656 = vadd.f32 %v518, %v655
          %v657 = vpop.f32.mrf.mxu0
          %v658 = vpop.f32.mrf.mxu0
          %v659 = vadd.f32 %v518, %v658
          %v660 = vpop.f32.mrf.mxu0
          %661 = vdwg.mxu0
          %v662 = vmax.f32 %v600, 0.0
          %v663 = vmax.f32 %v603, 0.0
          %v664 = vmax.f32 %v608, 0.0
          %v665 = vmax.f32 %v611, 0.0
          %v666 = vmax.f32 %v616, 0.0
          %v667 = vmax.f32 %v619, 0.0
          %v668 = vmax.f32 %v624, 0.0
          %v669 = vmax.f32 %v627, 0.0
          %v670 = vmax.f32 %v632, 0.0
          %v671 = vmax.f32 %v635, 0.0
          %v672 = vmax.f32 %v640, 0.0
          %v673 = vmax.f32 %v643, 0.0
          %v674 = vmax.f32 %v648, 0.0
          %v675 = vmax.f32 %v651, 0.0
          %v676 = vmax.f32 %v656, 0.0
          %v677 = vmax.f32 %v659, 0.0
          %vm678 = vcmask 261120
          %v679 = vsel %vm678, %v662, 0.0
          %v680 = vsel %vm678, %v663, 0.0
          %v681 = vadd.f32 %v679, %v680
          %v682 = vsel %vm678, %v664, 0.0
          %v683 = vadd.f32 %v681, %v682
          %v684 = vsel %vm678, %v665, 0.0
          %v685 = vadd.f32 %v683, %v684
          %v686 = vsel %vm678, %v666, 0.0
          %v687 = vadd.f32 %v685, %v686
          %v688 = vsel %vm678, %v667, 0.0
          %v689 = vadd.f32 %v687, %v688
          %v690 = vsel %vm678, %v668, 0.0
          %v691 = vadd.f32 %v689, %v690
          %v692 = vsel %vm678, %v669, 0.0
          %v693 = vadd.f32 %v691, %v692
          %v694 = vsel %vm678, %v670, 0.0
          %v695 = vadd.f32 %v693, %v694
          %v696 = vsel %vm678, %v671, 0.0
          %v697 = vadd.f32 %v695, %v696
          %v698 = vsel %vm678, %v672, 0.0
          %v699 = vadd.f32 %v697, %v698
          %v700 = vsel %vm678, %v673, 0.0
          %v701 = vadd.f32 %v699, %v700
          %v702 = vsel %vm678, %v674, 0.0
          %v703 = vadd.f32 %v701, %v702
          %v704 = vsel %vm678, %v675, 0.0
          %v705 = vadd.f32 %v703, %v704
          %v706 = vsel %vm678, %v676, 0.0
          %v707 = vadd.f32 %v705, %v706
          %v708 = vsel %vm678, %v677, 0.0
          %v709 = vadd.f32 %v707, %v708
          %v710 = vrot.slane %v709, 4
          %v711 = vadd.f32 %v709, %v710
          %v712 = vrot.slane %v711, 2
          %v713 = vadd.f32 %v711, %v712
          %v714 = vrot.slane %v713, 1
          %v715 = vadd.f32 %v713, %v714
          %v716 = vadd.f32 %v715, 0.0
          %s717 = sadd.s32 0, 1
          %s718 = smul.addr %s717, 2
          %s719 = scalar_lea.vmem %s443, %s718 [#allocation3]
          %v720 = vld [vmem:[%s719] sm:$0x3]
          %721 = vxpose.xlu0.c.b16.start [1/8] %v720, 128
          %722 = vxpose.xlu0.c.b16.cont [2/8] 0, 128
          %723 = vxpose.xlu0.c.b16.cont [3/8] 0, 128
          %724 = vxpose.xlu0.c.b16.cont [4/8] 0, 128
          %725 = vxpose.xlu0.c.b16.cont [5/8] 0, 128
          %726 = vxpose.xlu0.c.b16.cont [6/8] 0, 128
          %727 = vxpose.xlu0.c.b16.cont [7/8] 0, 128
          %728 = vxpose.xlu0.c.b16.end [8/8] 0, 128
          %v729 = vpop.trf.xlu0
          %v730 = vpop.trf.xlu0
          %v731 = vpop.trf.xlu0
          %v732 = vpop.trf.xlu0
          %v733 = vpop.trf.xlu0
          %v734 = vpop.trf.xlu0
          %v735 = vpop.trf.xlu0
          %v736 = vpop.trf.xlu0
          %v738 = vsel %vm536, %v729, 0
          %v741 = vsel %vm536, %v730, 0
          %v744 = vsel %vm536, %v731, 0
          %v747 = vsel %vm536, %v732, 0
          %v750 = vsel %vm536, %v733, 0
          %v753 = vsel %vm536, %v734, 0
          %v756 = vsel %vm536, %v735, 0
          %v759 = vsel %vm536, %v736, 0
          %761 = vmatprep.subr.bf16.mxu0 0
          %762 = vmatpush1.bf16.msra.mxu0 0
          %763 = vmatprep.subr.bf16.mxu0 0
          %764 = vmatpush1.bf16.msra.mxu0 0
          %765 = vmatprep.subr.bf16.mxu0 0
          %766 = vmatpush1.bf16.msra.mxu0 0
          %767 = vmatprep.subr.bf16.mxu0 0
          %768 = vmatpush1.bf16.msra.mxu0 0
          %769 = vmatprep.subr.bf16.mxu0 0
          %770 = vmatpush1.bf16.msra.mxu0 0
          %771 = vmatprep.subr.bf16.mxu0 0
          %772 = vmatpush1.bf16.msra.mxu0 0
          %773 = vmatprep.subr.bf16.mxu0 0
          %774 = vmatpush1.bf16.msra.mxu0 0
          %775 = vmatprep.subr.bf16.mxu0 0
          %776 = vmatpush1.bf16.msra.mxu0 %v563
          %777 = vmatprep.subr.bf16.mxu0 0
          %778 = vmatpush2.bf16.msra.mxu0 0
          %779 = vmatprep.subr.bf16.mxu0 0
          %780 = vmatpush2.bf16.msra.mxu0 0
          %781 = vmatprep.subr.bf16.mxu0 0
          %782 = vmatpush2.bf16.msra.mxu0 0
          %783 = vmatprep.subr.bf16.mxu0 0
          %784 = vmatpush2.bf16.msra.mxu0 0
          %785 = vmatprep.subr.bf16.mxu0 0
          %786 = vmatpush2.bf16.msra.mxu0 0
          %787 = vmatprep.subr.bf16.mxu0 0
          %788 = vmatpush2.bf16.msra.mxu0 0
          %789 = vmatprep.subr.bf16.mxu0 0
          %790 = vmatpush2.bf16.msra.mxu0 0
          %791 = vmatprep.subr.bf16.mxu0 0
          %792 = vmatpush2.bf16.msra.mxu0 0
          %793 = vmatprep.mubr.bf16.mxu0 0
          %794 = vmatmul.mubr.bf16.gmra.mxu0 %v738
          %v795 = vpop.f32.mrf.mxu0
          %v796 = vadd.f32 %v518, %v795
          %v797 = vpop.f32.mrf.mxu0
          %v798 = vpop.f32.mrf.mxu0
          %v799 = vadd.f32 %v518, %v798
          %v800 = vpop.f32.mrf.mxu0
          %801 = vmatprep.mubr.bf16.mxu0 0
          %802 = vmatmul.mubr.bf16.gmra.mxu0 %v741
          %v803 = vpop.f32.mrf.mxu0
          %v804 = vadd.f32 %v518, %v803
          %v805 = vpop.f32.mrf.mxu0
          %v806 = vpop.f32.mrf.mxu0
          %v807 = vadd.f32 %v518, %v806
          %v808 = vpop.f32.mrf.mxu0
          %809 = vmatprep.mubr.bf16.mxu0 0
          %810 = vmatmul.mubr.bf16.gmra.mxu0 %v744
          %v811 = vpop.f32.mrf.mxu0
          %v812 = vadd.f32 %v518, %v811
          %v813 = vpop.f32.mrf.mxu0
          %v814 = vpop.f32.mrf.mxu0
          %v815 = vadd.f32 %v518, %v814
          %v816 = vpop.f32.mrf.mxu0
          %817 = vmatprep.mubr.bf16.mxu0 0
          %818 = vmatmul.mubr.bf16.gmra.mxu0 %v747
          %v819 = vpop.f32.mrf.mxu0
          %v820 = vadd.f32 %v518, %v819
          %v821 = vpop.f32.mrf.mxu0
          %v822 = vpop.f32.mrf.mxu0
          %v823 = vadd.f32 %v518, %v822
          %v824 = vpop.f32.mrf.mxu0
          %825 = vmatprep.mubr.bf16.mxu0 0
          %826 = vmatmul.mubr.bf16.gmra.mxu0 %v750
          %v827 = vpop.f32.mrf.mxu0
          %v828 = vadd.f32 %v518, %v827
          %v829 = vpop.f32.mrf.mxu0
          %v830 = vpop.f32.mrf.mxu0
          %v831 = vadd.f32 %v518, %v830
          %v832 = vpop.f32.mrf.mxu0
          %833 = vmatprep.mubr.bf16.mxu0 0
          %834 = vmatmul.mubr.bf16.gmra.mxu0 %v753
          %v835 = vpop.f32.mrf.mxu0
          %v836 = vadd.f32 %v518, %v835
          %v837 = vpop.f32.mrf.mxu0
          %v838 = vpop.f32.mrf.mxu0
          %v839 = vadd.f32 %v518, %v838
          %v840 = vpop.f32.mrf.mxu0
          %841 = vmatprep.mubr.bf16.mxu0 0
          %842 = vmatmul.mubr.bf16.gmra.mxu0 %v756
          %v843 = vpop.f32.mrf.mxu0
          %v844 = vadd.f32 %v518, %v843
          %v845 = vpop.f32.mrf.mxu0
          %v846 = vpop.f32.mrf.mxu0
          %v847 = vadd.f32 %v518, %v846
          %v848 = vpop.f32.mrf.mxu0
          %849 = vmatprep.mubr.bf16.mxu0 0
          %850 = vmatmul.mubr.bf16.gmra.mxu0 %v759
          %v851 = vpop.f32.mrf.mxu0
          %v852 = vadd.f32 %v518, %v851
          %v853 = vpop.f32.mrf.mxu0
          %v854 = vpop.f32.mrf.mxu0
          %v855 = vadd.f32 %v518, %v854
          %v856 = vpop.f32.mrf.mxu0
          %857 = vdwg.mxu0
          %v858 = vmax.f32 %v796, 0.0
          %v859 = vmax.f32 %v799, 0.0
          %v860 = vmax.f32 %v804, 0.0
          %v861 = vmax.f32 %v807, 0.0
          %v862 = vmax.f32 %v812, 0.0
          %v863 = vmax.f32 %v815, 0.0
          %v864 = vmax.f32 %v820, 0.0
          %v865 = vmax.f32 %v823, 0.0
          %v866 = vmax.f32 %v828, 0.0
          %v867 = vmax.f32 %v831, 0.0
          %v868 = vmax.f32 %v836, 0.0
          %v869 = vmax.f32 %v839, 0.0
          %v870 = vmax.f32 %v844, 0.0
          %v871 = vmax.f32 %v847, 0.0
          %v872 = vmax.f32 %v852, 0.0
          %v873 = vmax.f32 %v855, 0.0
          %v874 = vsel %vm678, %v858, 0.0
          %v875 = vsel %vm678, %v859, 0.0
          %v876 = vadd.f32 %v874, %v875
          %v877 = vsel %vm678, %v860, 0.0
          %v878 = vadd.f32 %v876, %v877
          %v879 = vsel %vm678, %v861, 0.0
          %v880 = vadd.f32 %v878, %v879
          %v881 = vsel %vm678, %v862, 0.0
          %v882 = vadd.f32 %v880, %v881
          %v883 = vsel %vm678, %v863, 0.0
          %v884 = vadd.f32 %v882, %v883
          %v885 = vsel %vm678, %v864, 0.0
          %v886 = vadd.f32 %v884, %v885
          %v887 = vsel %vm678, %v865, 0.0
          %v888 = vadd.f32 %v886, %v887
          %v889 = vsel %vm678, %v866, 0.0
          %v890 = vadd.f32 %v888, %v889
          %v891 = vsel %vm678, %v867, 0.0
          %v892 = vadd.f32 %v890, %v891
          %v893 = vsel %vm678, %v868, 0.0
          %v894 = vadd.f32 %v892, %v893
          %v895 = vsel %vm678, %v869, 0.0
          %v896 = vadd.f32 %v894, %v895
          %v897 = vsel %vm678, %v870, 0.0
          %v898 = vadd.f32 %v896, %v897
          %v899 = vsel %vm678, %v871, 0.0
          %v900 = vadd.f32 %v898, %v899
          %v901 = vsel %vm678, %v872, 0.0
          %v902 = vadd.f32 %v900, %v901
          %v903 = vsel %vm678, %v873, 0.0
          %v904 = vadd.f32 %v902, %v903
          %v905 = vrot.slane %v904, 4
          %v906 = vadd.f32 %v904, %v905
          %v907 = vrot.slane %v906, 2
          %v908 = vadd.f32 %v906, %v907
          %v909 = vrot.slane %v908, 1
          %v910 = vadd.f32 %v908, %v909
          %v911 = vadd.f32 %v910, 0.0
          %v912 = vld [vmem:[#allocation2] sm:$0x3]
          %vm913 = vcmask 1040384
          %v914 = vsel %vm913, %v716, %v911
          %v915 = vadd.f32 %v912, %v914
          %vm916 = vcmask 254976
          %917 = vst.msk [vmem:[#allocation2] sm:$0x3] %vm916, %v915
        $region136: #{simclr_forward.1} parent=119 // pred_fallthru
          _
        %p918 = scmp.eq.s32.totalorder %s25, 1
        // Predicated region
        $region137: #{simclr_forward.1} parent=119 // pred_check
          %p919 = pneg %p918
        $region138: #{simclr_forward.1} parent=119 // pred_check_branch
          %921 = sbr.rel (%p919) target = $region140
        $region139: #{simclr_forward.1} parent=119 // pred_region
          %v922 = vld [vmem:[%s450] sm:$0x3]
          %v924 = vlaneseq
          %v925 = vshrl.u32 %v924, 7
          %v926 = vsub.s32 0, %v925
          %v927 = vrot.slane %v508, %v926
          %929 = vxpose.xlu0.c.b16.start [1/8] %v922, 128
          %930 = vxpose.xlu0.c.b16.cont [2/8] 0, 128
          %931 = vxpose.xlu0.c.b16.cont [3/8] 0, 128
          %932 = vxpose.xlu0.c.b16.cont [4/8] 0, 128
          %933 = vxpose.xlu0.c.b16.cont [5/8] 0, 128
          %934 = vxpose.xlu0.c.b16.cont [6/8] 0, 128
          %935 = vxpose.xlu0.c.b16.cont [7/8] 0, 128
          %936 = vxpose.xlu0.c.b16.end [8/8] 0, 128
          %v937 = vpop.trf.xlu0
          %v938 = vpop.trf.xlu0
          %v939 = vpop.trf.xlu0
          %v940 = vpop.trf.xlu0
          %v941 = vpop.trf.xlu0
          %v942 = vpop.trf.xlu0
          %v943 = vpop.trf.xlu0
          %v944 = vpop.trf.xlu0
          %vm945 = vcmask 31744
          %v947 = vsel %vm945, %v937, 0
          %v950 = vsel %vm945, %v938, 0
          %v953 = vsel %vm945, %v939, 0
          %v956 = vsel %vm945, %v940, 0
          %v959 = vsel %vm945, %v941, 0
          %v962 = vsel %vm945, %v942, 0
          %v965 = vsel %vm945, %v943, 0
          %v968 = vsel %vm945, %v944, 0
          %vm970 = vcmask 1041408
          %v972 = vsel %vm970, %v507, 0
          %974 = vmatprep.subr.bf16.mxu0 0
          %975 = vmatpush1.bf16.msra.mxu0 0
          %976 = vmatprep.subr.bf16.mxu0 0
          %977 = vmatpush1.bf16.msra.mxu0 0
          %978 = vmatprep.subr.bf16.mxu0 0
          %979 = vmatpush1.bf16.msra.mxu0 0
          %980 = vmatprep.subr.bf16.mxu0 0
          %981 = vmatpush1.bf16.msra.mxu0 0
          %982 = vmatprep.subr.bf16.mxu0 0
          %983 = vmatpush1.bf16.msra.mxu0 0
          %984 = vmatprep.subr.bf16.mxu0 0
          %985 = vmatpush1.bf16.msra.mxu0 0
          %986 = vmatprep.subr.bf16.mxu0 0
          %987 = vmatpush1.bf16.msra.mxu0 0
          %988 = vmatprep.subr.bf16.mxu0 0
          %989 = vmatpush1.bf16.msra.mxu0 %v972
          %990 = vmatprep.subr.bf16.mxu0 0
          %991 = vmatpush2.bf16.msra.mxu0 0
          %992 = vmatprep.subr.bf16.mxu0 0
          %993 = vmatpush2.bf16.msra.mxu0 0
          %994 = vmatprep.subr.bf16.mxu0 0
          %995 = vmatpush2.bf16.msra.mxu0 0
          %996 = vmatprep.subr.bf16.mxu0 0
          %997 = vmatpush2.bf16.msra.mxu0 0
          %998 = vmatprep.subr.bf16.mxu0 0
          %999 = vmatpush2.bf16.msra.mxu0 0
          %1000 = vmatprep.subr.bf16.mxu0 0
          %1001 = vmatpush2.bf16.msra.mxu0 0
          %1002 = vmatprep.subr.bf16.mxu0 0
          %1003 = vmatpush2.bf16.msra.mxu0 0
          %1004 = vmatprep.subr.bf16.mxu0 0
          %1005 = vmatpush2.bf16.msra.mxu0 0
          %1006 = vmatprep.mubr.bf16.mxu0 0
          %1007 = vmatmul.mubr.bf16.gmra.mxu0 %v947
          %v1008 = vpop.f32.mrf.mxu0
          %v1009 = vadd.f32 %v927, %v1008
          %v1010 = vpop.f32.mrf.mxu0
          %v1011 = vpop.f32.mrf.mxu0
          %v1012 = vadd.f32 %v927, %v1011
          %v1013 = vpop.f32.mrf.mxu0
          %1014 = vmatprep.mubr.bf16.mxu0 0
          %1015 = vmatmul.mubr.bf16.gmra.mxu0 %v950
          %v1016 = vpop.f32.mrf.mxu0
          %v1017 = vadd.f32 %v927, %v1016
          %v1018 = vpop.f32.mrf.mxu0
          %v1019 = vpop.f32.mrf.mxu0
          %v1020 = vadd.f32 %v927, %v1019
          %v1021 = vpop.f32.mrf.mxu0
          %1022 = vmatprep.mubr.bf16.mxu0 0
          %1023 = vmatmul.mubr.bf16.gmra.mxu0 %v953
          %v1024 = vpop.f32.mrf.mxu0
          %v1025 = vadd.f32 %v927, %v1024
          %v1026 = vpop.f32.mrf.mxu0
          %v1027 = vpop.f32.mrf.mxu0
          %v1028 = vadd.f32 %v927, %v1027
          %v1029 = vpop.f32.mrf.mxu0
          %1030 = vmatprep.mubr.bf16.mxu0 0
          %1031 = vmatmul.mubr.bf16.gmra.mxu0 %v956
          %v1032 = vpop.f32.mrf.mxu0
          %v1033 = vadd.f32 %v927, %v1032
          %v1034 = vpop.f32.mrf.mxu0
          %v1035 = vpop.f32.mrf.mxu0
          %v1036 = vadd.f32 %v927, %v1035
          %v1037 = vpop.f32.mrf.mxu0
          %1038 = vmatprep.mubr.bf16.mxu0 0
          %1039 = vmatmul.mubr.bf16.gmra.mxu0 %v959
          %v1040 = vpop.f32.mrf.mxu0
          %v1041 = vadd.f32 %v927, %v1040
          %v1042 = vpop.f32.mrf.mxu0
          %v1043 = vpop.f32.mrf.mxu0
          %v1044 = vadd.f32 %v927, %v1043
          %v1045 = vpop.f32.mrf.mxu0
          %1046 = vmatprep.mubr.bf16.mxu0 0
          %1047 = vmatmul.mubr.bf16.gmra.mxu0 %v962
          %v1048 = vpop.f32.mrf.mxu0
          %v1049 = vadd.f32 %v927, %v1048
          %v1050 = vpop.f32.mrf.mxu0
          %v1051 = vpop.f32.mrf.mxu0
          %v1052 = vadd.f32 %v927, %v1051
          %v1053 = vpop.f32.mrf.mxu0
          %1054 = vmatprep.mubr.bf16.mxu0 0
          %1055 = vmatmul.mubr.bf16.gmra.mxu0 %v965
          %v1056 = vpop.f32.mrf.mxu0
          %v1057 = vadd.f32 %v927, %v1056
          %v1058 = vpop.f32.mrf.mxu0
          %v1059 = vpop.f32.mrf.mxu0
          %v1060 = vadd.f32 %v927, %v1059
          %v1061 = vpop.f32.mrf.mxu0
          %1062 = vmatprep.mubr.bf16.mxu0 0
          %1063 = vmatmul.mubr.bf16.gmra.mxu0 %v968
          %v1064 = vpop.f32.mrf.mxu0
          %v1065 = vadd.f32 %v927, %v1064
          %v1066 = vpop.f32.mrf.mxu0
          %v1067 = vpop.f32.mrf.mxu0
          %v1068 = vadd.f32 %v927, %v1067
          %v1069 = vpop.f32.mrf.mxu0
          %1070 = vdwg.mxu0
          %v1071 = vmax.f32 %v1009, 0.0
          %v1072 = vmax.f32 %v1012, 0.0
          %v1073 = vmax.f32 %v1017, 0.0
          %v1074 = vmax.f32 %v1020, 0.0
          %v1075 = vmax.f32 %v1025, 0.0
          %v1076 = vmax.f32 %v1028, 0.0
          %v1077 = vmax.f32 %v1033, 0.0
          %v1078 = vmax.f32 %v1036, 0.0
          %v1079 = vmax.f32 %v1041, 0.0
          %v1080 = vmax.f32 %v1044, 0.0
          %v1081 = vmax.f32 %v1049, 0.0
          %v1082 = vmax.f32 %v1052, 0.0
          %v1083 = vmax.f32 %v1057, 0.0
          %v1084 = vmax.f32 %v1060, 0.0
          %v1085 = vmax.f32 %v1065, 0.0
          %v1086 = vmax.f32 %v1068, 0.0
          %vm1087 = vcmask 261120
          %v1088 = vsel %vm1087, %v1071, 0.0
          %v1089 = vsel %vm1087, %v1072, 0.0
          %v1090 = vadd.f32 %v1088, %v1089
          %v1091 = vsel %vm1087, %v1073, 0.0
          %v1092 = vadd.f32 %v1090, %v1091
          %v1093 = vsel %vm1087, %v1074, 0.0
          %v1094 = vadd.f32 %v1092, %v1093
          %v1095 = vsel %vm1087, %v1075, 0.0
          %v1096 = vadd.f32 %v1094, %v1095
          %v1097 = vsel %vm1087, %v1076, 0.0
          %v1098 = vadd.f32 %v1096, %v1097
          %v1099 = vsel %vm1087, %v1077, 0.0
          %v1100 = vadd.f32 %v1098, %v1099
          %v1101 = vsel %vm1087, %v1078, 0.0
          %v1102 = vadd.f32 %v1100, %v1101
          %v1103 = vsel %vm1087, %v1079, 0.0
          %v1104 = vadd.f32 %v1102, %v1103
          %v1105 = vsel %vm1087, %v1080, 0.0
          %v1106 = vadd.f32 %v1104, %v1105
          %v1107 = vsel %vm1087, %v1081, 0.0
          %v1108 = vadd.f32 %v1106, %v1107
          %v1109 = vsel %vm1087, %v1082, 0.0
          %v1110 = vadd.f32 %v1108, %v1109
          %v1111 = vsel %vm1087, %v1083, 0.0
          %v1112 = vadd.f32 %v1110, %v1111
          %v1113 = vsel %vm1087, %v1084, 0.0
          %v1114 = vadd.f32 %v1112, %v1113
          %v1115 = vsel %vm1087, %v1085, 0.0
          %v1116 = vadd.f32 %v1114, %v1115
          %v1117 = vsel %vm1087, %v1086, 0.0
          %v1118 = vadd.f32 %v1116, %v1117
          %v1119 = vrot.slane %v1118, 4
          %v1120 = vadd.f32 %v1118, %v1119
          %v1121 = vrot.slane %v1120, 2
          %v1122 = vadd.f32 %v1120, %v1121
          %v1123 = vrot.slane %v1122, 1
          %v1124 = vadd.f32 %v1122, %v1123
          %v1125 = vadd.f32 %v1124, 0.0
          %s1126 = sadd.s32 0, 1
          %s1127 = smul.addr %s1126, 2
          %s1128 = scalar_lea.vmem %s450, %s1127 [#allocation4]
          %v1129 = vld [vmem:[%s1128] sm:$0x3]
          %1130 = vxpose.xlu0.c.b16.start [1/8] %v1129, 128
          %1131 = vxpose.xlu0.c.b16.cont [2/8] 0, 128
          %1132 = vxpose.xlu0.c.b16.cont [3/8] 0, 128
          %1133 = vxpose.xlu0.c.b16.cont [4/8] 0, 128
          %1134 = vxpose.xlu0.c.b16.cont [5/8] 0, 128
          %1135 = vxpose.xlu0.c.b16.cont [6/8] 0, 128
          %1136 = vxpose.xlu0.c.b16.cont [7/8] 0, 128
          %1137 = vxpose.xlu0.c.b16.end [8/8] 0, 128
          %v1138 = vpop.trf.xlu0
          %v1139 = vpop.trf.xlu0
          %v1140 = vpop.trf.xlu0
          %v1141 = vpop.trf.xlu0
          %v1142 = vpop.trf.xlu0
          %v1143 = vpop.trf.xlu0
          %v1144 = vpop.trf.xlu0
          %v1145 = vpop.trf.xlu0
          %v1147 = vsel %vm945, %v1138, 0
          %v1150 = vsel %vm945, %v1139, 0
          %v1153 = vsel %vm945, %v1140, 0
          %v1156 = vsel %vm945, %v1141, 0
          %v1159 = vsel %vm945, %v1142, 0
          %v1162 = vsel %vm945, %v1143, 0
          %v1165 = vsel %vm945, %v1144, 0
          %v1168 = vsel %vm945, %v1145, 0
          %1170 = vmatprep.subr.bf16.mxu0 0
          %1171 = vmatpush1.bf16.msra.mxu0 0
          %1172 = vmatprep.subr.bf16.mxu0 0
          %1173 = vmatpush1.bf16.msra.mxu0 0
          %1174 = vmatprep.subr.bf16.mxu0 0
          %1175 = vmatpush1.bf16.msra.mxu0 0
          %1176 = vmatprep.subr.bf16.mxu0 0
          %1177 = vmatpush1.bf16.msra.mxu0 0
          %1178 = vmatprep.subr.bf16.mxu0 0
          %1179 = vmatpush1.bf16.msra.mxu0 0
          %1180 = vmatprep.subr.bf16.mxu0 0
          %1181 = vmatpush1.bf16.msra.mxu0 0
          %1182 = vmatprep.subr.bf16.mxu0 0
          %1183 = vmatpush1.bf16.msra.mxu0 0
          %1184 = vmatprep.subr.bf16.mxu0 0
          %1185 = vmatpush1.bf16.msra.mxu0 %v972
          %1186 = vmatprep.subr.bf16.mxu0 0
          %1187 = vmatpush2.bf16.msra.mxu0 0
          %1188 = vmatprep.subr.bf16.mxu0 0
          %1189 = vmatpush2.bf16.msra.mxu0 0
          %1190 = vmatprep.subr.bf16.mxu0 0
          %1191 = vmatpush2.bf16.msra.mxu0 0
          %1192 = vmatprep.subr.bf16.mxu0 0
          %1193 = vmatpush2.bf16.msra.mxu0 0
          %1194 = vmatprep.subr.bf16.mxu0 0
          %1195 = vmatpush2.bf16.msra.mxu0 0
          %1196 = vmatprep.subr.bf16.mxu0 0
          %1197 = vmatpush2.bf16.msra.mxu0 0
          %1198 = vmatprep.subr.bf16.mxu0 0
          %1199 = vmatpush2.bf16.msra.mxu0 0
          %1200 = vmatprep.subr.bf16.mxu0 0
          %1201 = vmatpush2.bf16.msra.mxu0 0
          %1202 = vmatprep.mubr.bf16.mxu0 0
          %1203 = vmatmul.mubr.bf16.gmra.mxu0 %v1147
          %v1204 = vpop.f32.mrf.mxu0
          %v1205 = vadd.f32 %v927, %v1204
          %v1206 = vpop.f32.mrf.mxu0
          %v1207 = vpop.f32.mrf.mxu0
          %v1208 = vadd.f32 %v927, %v1207
          %v1209 = vpop.f32.mrf.mxu0
          %1210 = vmatprep.mubr.bf16.mxu0 0
          %1211 = vmatmul.mubr.bf16.gmra.mxu0 %v1150
          %v1212 = vpop.f32.mrf.mxu0
          %v1213 = vadd.f32 %v927, %v1212
          %v1214 = vpop.f32.mrf.mxu0
          %v1215 = vpop.f32.mrf.mxu0
          %v1216 = vadd.f32 %v927, %v1215
          %v1217 = vpop.f32.mrf.mxu0
          %1218 = vmatprep.mubr.bf16.mxu0 0
          %1219 = vmatmul.mubr.bf16.gmra.mxu0 %v1153
          %v1220 = vpop.f32.mrf.mxu0
          %v1221 = vadd.f32 %v927, %v1220
          %v1222 = vpop.f32.mrf.mxu0
          %v1223 = vpop.f32.mrf.mxu0
          %v1224 = vadd.f32 %v927, %v1223
          %v1225 = vpop.f32.mrf.mxu0
          %1226 = vmatprep.mubr.bf16.mxu0 0
          %1227 = vmatmul.mubr.bf16.gmra.mxu0 %v1156
          %v1228 = vpop.f32.mrf.mxu0
          %v1229 = vadd.f32 %v927, %v1228
          %v1230 = vpop.f32.mrf.mxu0
          %v1231 = vpop.f32.mrf.mxu0
          %v1232 = vadd.f32 %v927, %v1231
          %v1233 = vpop.f32.mrf.mxu0
          %1234 = vmatprep.mubr.bf16.mxu0 0
          %1235 = vmatmul.mubr.bf16.gmra.mxu0 %v1159
          %v1236 = vpop.f32.mrf.mxu0
          %v1237 = vadd.f32 %v927, %v1236
          %v1238 = vpop.f32.mrf.mxu0
          %v1239 = vpop.f32.mrf.mxu0
          %v1240 = vadd.f32 %v927, %v1239
          %v1241 = vpop.f32.mrf.mxu0
          %1242 = vmatprep.mubr.bf16.mxu0 0
          %1243 = vmatmul.mubr.bf16.gmra.mxu0 %v1162
          %v1244 = vpop.f32.mrf.mxu0
          %v1245 = vadd.f32 %v927, %v1244
          %v1246 = vpop.f32.mrf.mxu0
          %v1247 = vpop.f32.mrf.mxu0
          %v1248 = vadd.f32 %v927, %v1247
          %v1249 = vpop.f32.mrf.mxu0
          %1250 = vmatprep.mubr.bf16.mxu0 0
          %1251 = vmatmul.mubr.bf16.gmra.mxu0 %v1165
          %v1252 = vpop.f32.mrf.mxu0
          %v1253 = vadd.f32 %v927, %v1252
          %v1254 = vpop.f32.mrf.mxu0
          %v1255 = vpop.f32.mrf.mxu0
          %v1256 = vadd.f32 %v927, %v1255
          %v1257 = vpop.f32.mrf.mxu0
          %1258 = vmatprep.mubr.bf16.mxu0 0
          %1259 = vmatmul.mubr.bf16.gmra.mxu0 %v1168
          %v1260 = vpop.f32.mrf.mxu0
          %v1261 = vadd.f32 %v927, %v1260
          %v1262 = vpop.f32.mrf.mxu0
          %v1263 = vpop.f32.mrf.mxu0
          %v1264 = vadd.f32 %v927, %v1263
          %v1265 = vpop.f32.mrf.mxu0
          %1266 = vdwg.mxu0
          %v1267 = vmax.f32 %v1205, 0.0
          %v1268 = vmax.f32 %v1208, 0.0
          %v1269 = vmax.f32 %v1213, 0.0
          %v1270 = vmax.f32 %v1216, 0.0
          %v1271 = vmax.f32 %v1221, 0.0
          %v1272 = vmax.f32 %v1224, 0.0
          %v1273 = vmax.f32 %v1229, 0.0
          %v1274 = vmax.f32 %v1232, 0.0
          %v1275 = vmax.f32 %v1237, 0.0
          %v1276 = vmax.f32 %v1240, 0.0
          %v1277 = vmax.f32 %v1245, 0.0
          %v1278 = vmax.f32 %v1248, 0.0
          %v1279 = vmax.f32 %v1253, 0.0
          %v1280 = vmax.f32 %v1256, 0.0
          %v1281 = vmax.f32 %v1261, 0.0
          %v1282 = vmax.f32 %v1264, 0.0
          %v1283 = vsel %vm1087, %v1267, 0.0
          %v1284 = vsel %vm1087, %v1268, 0.0
          %v1285 = vadd.f32 %v1283, %v1284
          %v1286 = vsel %vm1087, %v1269, 0.0
          %v1287 = vadd.f32 %v1285, %v1286
          %v1288 = vsel %vm1087, %v1270, 0.0
          %v1289 = vadd.f32 %v1287, %v1288
          %v1290 = vsel %vm1087, %v1271, 0.0
          %v1291 = vadd.f32 %v1289, %v1290
          %v1292 = vsel %vm1087, %v1272, 0.0
          %v1293 = vadd.f32 %v1291, %v1292
          %v1294 = vsel %vm1087, %v1273, 0.0
          %v1295 = vadd.f32 %v1293, %v1294
          %v1296 = vsel %vm1087, %v1274, 0.0
          %v1297 = vadd.f32 %v1295, %v1296
          %v1298 = vsel %vm1087, %v1275, 0.0
          %v1299 = vadd.f32 %v1297, %v1298
          %v1300 = vsel %vm1087, %v1276, 0.0
          %v1301 = vadd.f32 %v1299, %v1300
          %v1302 = vsel %vm1087, %v1277, 0.0
          %v1303 = vadd.f32 %v1301, %v1302
          %v1304 = vsel %vm1087, %v1278, 0.0
          %v1305 = vadd.f32 %v1303, %v1304
          %v1306 = vsel %vm1087, %v1279, 0.0
          %v1307 = vadd.f32 %v1305, %v1306
          %v1308 = vsel %vm1087, %v1280, 0.0
          %v1309 = vadd.f32 %v1307, %v1308
          %v1310 = vsel %vm1087, %v1281, 0.0
          %v1311 = vadd.f32 %v1309, %v1310
          %v1312 = vsel %vm1087, %v1282, 0.0
          %v1313 = vadd.f32 %v1311, %v1312
          %v1314 = vrot.slane %v1313, 4
          %v1315 = vadd.f32 %v1313, %v1314
          %v1316 = vrot.slane %v1315, 2
          %v1317 = vadd.f32 %v1315, %v1316
          %v1318 = vrot.slane %v1317, 1
          %v1319 = vadd.f32 %v1317, %v1318
          %v1320 = vadd.f32 %v1319, 0.0
          %v1321 = vld [vmem:[#allocation2] sm:$0x3]
          %vm1322 = vcmask 1040384
          %v1323 = vsel %vm1322, %v1125, %v1320
          %v1324 = vadd.f32 %v1321, %v1323
          %vm1325 = vcmask 254976
          %1326 = vst.msk [vmem:[#allocation2] sm:$0x3] %vm1325, %v1324
        $region140: #{simclr_forward.1} parent=119 // pred_fallthru
          _
        %p1327 = scmp.eq.s32.totalorder %s26, 1
        // Predicated region
        $region141: #{simclr_forward.1} parent=119 // pred_check
          %p1328 = pneg %p1327
        $region142: #{simclr_forward.1} parent=119 // pred_check_branch
          %1330 = sbr.rel (%p1328) target = $region144
        $region143: #{simclr_forward.1} parent=119 // pred_region
          %v1331 = vld [vmem:[#allocation2] sm:$0x3]
          %v1332 = vmul.f32 %v1331, 0.00390625
          %v1333 = vld [vmem:[%s4] sm:$0xff]
          %v1334 = vld [vmem:[%s4 + $0x8] sm:$0xff]
          %v1335 = vld [vmem:[%s4 + $0x10] sm:$0xff]
          %v1336 = vld [vmem:[%s4 + $0x18] sm:$0xff]
          %v1337 = vld [vmem:[%s5] sm:$0x1]
          %v1339 = vlaneseq
          %v1340 = vshrl.u32 %v1339, 7
          %v1341 = vsub.s32 0, %v1340
          %v1342 = vrot.slane %v1337, %v1341
          %vm1344 = vcmask 261120
          %v1346 = vsel %vm1344, %v1332, 0
          %1348 = vmatprep.subr.mxu0 0.0
          %1349 = vmatpush1.msra.mxu0 0.0
          %1350 = vmatprep.subr.mxu0 0.0
          %1351 = vmatpush1.msra.mxu0 0.0
          %1352 = vmatprep.subr.mxu0 0.0
          %1353 = vmatpush1.msra.mxu0 0.0
          %1354 = vmatprep.subr.mxu0 0.0
          %1355 = vmatpush1.msra.mxu0 0.0
          %1356 = vmatprep.subr.mxu0 0.0
          %1357 = vmatpush1.msra.mxu0 0.0
          %1358 = vmatprep.subr.mxu0 0.0
          %1359 = vmatpush1.msra.mxu0 0.0
          %1360 = vmatprep.subr.mxu0 0.0
          %1361 = vmatpush1.msra.mxu0 0.0
          %1362 = vmatprep.subr.mxu0 0.0
          %1363 = vmatpush1.msra.mxu0 0.0
          %1364 = vmatprep.subr.mxu0 0.0
          %1365 = vmatpush1.msra.mxu0 0.0
          %1366 = vmatprep.subr.mxu0 0.0
          %1367 = vmatpush1.msra.mxu0 0.0
          %1368 = vmatprep.subr.mxu0 0.0
          %1369 = vmatpush1.msra.mxu0 0.0
          %1370 = vmatprep.subr.mxu0 0.0
          %1371 = vmatpush1.msra.mxu0 0.0
          %1372 = vmatprep.subr.mxu0 0.0
          %1373 = vmatpush1.msra.mxu0 %v1336
          %1374 = vmatprep.subr.mxu0 0.0
          %1375 = vmatpush1.msra.mxu0 %v1335
          %1376 = vmatprep.subr.mxu0 0.0
          %1377 = vmatpush1.msra.mxu0 %v1334
          %1378 = vmatprep.subr.mxu0 0.0
          %1379 = vmatpush1.msra.mxu0 %v1333
          %1380 = vmatprep.subr.mxu0 0.0
          %1381 = vmatpush2.msra.mxu0 0.0
          %1382 = vmatprep.subr.mxu0 0.0
          %1383 = vmatpush2.msra.mxu0 0.0
          %1384 = vmatprep.subr.mxu0 0.0
          %1385 = vmatpush2.msra.mxu0 0.0
          %1386 = vmatprep.subr.mxu0 0.0
          %1387 = vmatpush2.msra.mxu0 0.0
          %1388 = vmatprep.subr.mxu0 0.0
          %1389 = vmatpush2.msra.mxu0 0.0
          %1390 = vmatprep.subr.mxu0 0.0
          %1391 = vmatpush2.msra.mxu0 0.0
          %1392 = vmatprep.subr.mxu0 0.0
          %1393 = vmatpush2.msra.mxu0 0.0
          %1394 = vmatprep.subr.mxu0 0.0
          %1395 = vmatpush2.msra.mxu0 0.0
          %1396 = vmatprep.subr.mxu0 0.0
          %1397 = vmatpush2.msra.mxu0 0.0
          %1398 = vmatprep.subr.mxu0 0.0
          %1399 = vmatpush2.msra.mxu0 0.0
          %1400 = vmatprep.subr.mxu0 0.0
          %1401 = vmatpush2.msra.mxu0 0.0
          %1402 = vmatprep.subr.mxu0 0.0
          %1403 = vmatpush2.msra.mxu0 0.0
          %1404 = vmatprep.subr.mxu0 0.0
          %1405 = vmatpush2.msra.mxu0 0.0
          %1406 = vmatprep.subr.mxu0 0.0
          %1407 = vmatpush2.msra.mxu0 0.0
          %1408 = vmatprep.subr.mxu0 0.0
          %1409 = vmatpush2.msra.mxu0 0.0
          %1410 = vmatprep.subr.mxu0 0.0
          %1411 = vmatpush2.msra.mxu0 0.0
          %1412 = vmatprep.mubr.f32.mxu0 0.0
          %1413 = vmatmul.mubr.f32.gmra.mxu0 %v1346
          %v1414 = vpop.f32.mrf.mxu0
          %v1415 = vadd.f32 %v1342, %v1414
          %v1416 = vpop.f32.mrf.mxu0
          %1417 = vdwg.mxu0
          %vm1418 = vcmask 254976
          %v1419 = vsel %vm1418, %v1415, 0.0
          %v1420 = vrot.slane %v1419, 4
          %v1421 = vadd.f32 %v1419, %v1420
          %v1422 = vrot.slane %v1421, 2
          %v1423 = vadd.f32 %v1421, %v1422
          %v1424 = vrot.slane %v1423, 1
          %v1425 = vadd.f32 %v1423, %v1424
          %v1426 = vrcp.pop 2.0
          %v1427 = vmul.f32 %v1425, %v1426
          %v1428 = vsub.f32 %v1415, %v1427
          %v1429 = vmul.f32 %v1428, %v1428
          %v1430 = vsel %vm1418, %v1429, 0.0
          %v1431 = vrot.slane %v1430, 4
          %v1432 = vadd.f32 %v1430, %v1431
          %v1433 = vrot.slane %v1432, 2
          %v1434 = vadd.f32 %v1432, %v1433
          %v1435 = vrot.slane %v1434, 1
          %v1436 = vadd.f32 %v1434, %v1435
          %v1437 = vmul.f32 %v1436, %v1426
          %v1438 = vadd.f32 %v1437, 1e-05
          %v1439 = vrsqrt.pop %v1438
          %v1440 = vmul.f32 %v1428, %v1439
          %v1441 = vld [vmem:[%s6] sm:$0x1]
          %v1443 = vlaneseq
          %v1444 = vshrl.u32 %v1443, 7
          %v1445 = vsub.s32 0, %v1444
          %v1446 = vrot.slane %v1441, %v1445
          %v1448 = vmul.f32 %v1440, %v1446
          %v1449 = vld [vmem:[%s7] sm:$0x1]
          %v1451 = vlaneseq
          %v1452 = vshrl.u32 %v1451, 7
          %v1453 = vsub.s32 0, %v1452
          %v1454 = vrot.slane %v1449, %v1453
          %v1456 = vadd.f32 %v1448, %v1454
          %v1457 = vmax.f32 %v1456, 0.0
          %v1458 = vld [vmem:[%s8] sm:$0xff]
          %v1459 = vld [vmem:[%s8 + $0x8] sm:$0xff]
          %v1460 = vld [vmem:[%s8 + $0x10] sm:$0xff]
          %v1461 = vld [vmem:[%s8 + $0x18] sm:$0xff]
          %v1462 = vld [vmem:[%s9] sm:$0x1]
          %v1464 = vlaneseq
          %v1465 = vshrl.u32 %v1464, 7
          %v1466 = vsub.s32 0, %v1465
          %v1467 = vrot.slane %v1462, %v1466
          %v1470 = vsel %vm1344, %v1457, 0
          %1472 = vmatprep.subr.mxu0 0.0
          %1473 = vmatpush1.msra.mxu0 0.0
          %1474 = vmatprep.subr.mxu0 0.0
          %1475 = vmatpush1.msra.mxu0 0.0
          %1476 = vmatprep.subr.mxu0 0.0
          %1477 = vmatpush1.msra.mxu0 0.0
          %1478 = vmatprep.subr.mxu0 0.0
          %1479 = vmatpush1.msra.mxu0 0.0
          %1480 = vmatprep.subr.mxu0 0.0
          %1481 = vmatpush1.msra.mxu0 0.0
          %1482 = vmatprep.subr.mxu0 0.0
          %1483 = vmatpush1.msra.mxu0 0.0
          %1484 = vmatprep.subr.mxu0 0.0
          %1485 = vmatpush1.msra.mxu0 0.0
          %1486 = vmatprep.subr.mxu0 0.0
          %1487 = vmatpush1.msra.mxu0 0.0
          %1488 = vmatprep.subr.mxu0 0.0
          %1489 = vmatpush1.msra.mxu0 0.0
          %1490 = vmatprep.subr.mxu0 0.0
          %1491 = vmatpush1.msra.mxu0 0.0
          %1492 = vmatprep.subr.mxu0 0.0
          %1493 = vmatpush1.msra.mxu0 0.0
          %1494 = vmatprep.subr.mxu0 0.0
          %1495 = vmatpush1.msra.mxu0 0.0
          %1496 = vmatprep.subr.mxu0 0.0
          %1497 = vmatpush1.msra.mxu0 %v1461
          %1498 = vmatprep.subr.mxu0 0.0
          %1499 = vmatpush1.msra.mxu0 %v1460
          %1500 = vmatprep.subr.mxu0 0.0
          %1501 = vmatpush1.msra.mxu0 %v1459
          %1502 = vmatprep.subr.mxu0 0.0
          %1503 = vmatpush1.msra.mxu0 %v1458
          %1504 = vmatprep.subr.mxu0 0.0
          %1505 = vmatpush2.msra.mxu0 0.0
          %1506 = vmatprep.subr.mxu0 0.0
          %1507 = vmatpush2.msra.mxu0 0.0
          %1508 = vmatprep.subr.mxu0 0.0
          %1509 = vmatpush2.msra.mxu0 0.0
          %1510 = vmatprep.subr.mxu0 0.0
          %1511 = vmatpush2.msra.mxu0 0.0
          %1512 = vmatprep.subr.mxu0 0.0
          %1513 = vmatpush2.msra.mxu0 0.0
          %1514 = vmatprep.subr.mxu0 0.0
          %1515 = vmatpush2.msra.mxu0 0.0
          %1516 = vmatprep.subr.mxu0 0.0
          %1517 = vmatpush2.msra.mxu0 0.0
          %1518 = vmatprep.subr.mxu0 0.0
          %1519 = vmatpush2.msra.mxu0 0.0
          %1520 = vmatprep.subr.mxu0 0.0
          %1521 = vmatpush2.msra.mxu0 0.0
          %1522 = vmatprep.subr.mxu0 0.0
          %1523 = vmatpush2.msra.mxu0 0.0
          %1524 = vmatprep.subr.mxu0 0.0
          %1525 = vmatpush2.msra.mxu0 0.0
          %1526 = vmatprep.subr.mxu0 0.0
          %1527 = vmatpush2.msra.mxu0 0.0
          %1528 = vmatprep.subr.mxu0 0.0
          %1529 = vmatpush2.msra.mxu0 0.0
          %1530 = vmatprep.subr.mxu0 0.0
          %1531 = vmatpush2.msra.mxu0 0.0
          %1532 = vmatprep.subr.mxu0 0.0
          %1533 = vmatpush2.msra.mxu0 0.0
          %1534 = vmatprep.subr.mxu0 0.0
          %1535 = vmatpush2.msra.mxu0 0.0
          %1536 = vmatprep.mubr.f32.mxu0 0.0
          %1537 = vmatmul.mubr.f32.gmra.mxu0 %v1470
          %v1538 = vpop.f32.mrf.mxu0
          %v1539 = vadd.f32 %v1467, %v1538
          %v1540 = vpop.f32.mrf.mxu0
          %1541 = vdwg.mxu0
          %1542 = vst [vmem:[%s499] sm:$0x3] %v1539
        $region144: #{simclr_forward.1} parent=119 // pred_fallthru
          _
        %p1543 = scmp.lt.s32.totalorder %s25, 1
        %s1544 = scalar_select %p1543, %s25, 1
        %s1545 = smul.addr %s1544, 2
        %s1546 = scalar_lea.vmem %s10, %s1545
        // Predicated region
        $region145: #{simclr_forward.1} parent=119 // pred_check
          %p1547 = pneg %p287
        $region146: #{simclr_forward.1} parent=119 // pred_check_branch
          %1549 = sbr.rel (%p1547) target = $region148
        $region147: #{simclr_forward.1} parent=119 // pred_region
          _
        $region148: #{simclr_forward.1} parent=119 // pred_fallthru
          _
      $region120: #{simclr_forward.1} parent=5 // pred_fallthru
        _
      %p1550 = scmp.le.s32.totalorder 2, %s16
      // Predicated region
      $region149: #{simclr_forward.1} parent=5 // pred_check
        %p1551 = pneg %p1550
      $region150: #{simclr_forward.1} parent=5 // pred_check_branch
        %1553 = sbr.rel (%p1551) target = $region152
      $region151: #{simclr_forward.1} parent=5 // pred_region
        %s1554 = ssub.s32 %s16, 2
        // Predicated region
        $region153: #{simclr_forward.1} parent=151 // pred_check
          %p1555 = pneg %p293
        $region154: #{simclr_forward.1} parent=151 // pred_check_branch
          %1557 = sbr.rel (%p1555) target = $region156
        $region155: #{simclr_forward.1} parent=151 // pred_region
          %p1558 = scmp.lt.s32.totalorder %s27, 1
          %s1559 = scalar_select %p1558, %s27, 1
          %s1560 = smul.addr %s1559, 2
          %s1561 = scalar_lea.vmem %s10, %s1560
        $region156: #{simclr_forward.1} parent=151 // pred_fallthru
          _
      $region152: #{simclr_forward.1} parent=5 // pred_fallthru
        _
    $region6: #{simclr_forward.1} parent=1 // loop_footer
      %s20 = sadd.s32 1, %s16
    $region7: #{simclr_forward.1} parent=1 // loop_footer_branch
      %15 = sbr.rel target = $region3
    $region8: #{simclr_forward.1} parent=1 // loop_exit
      _

</llo_original>
